<compile_context>
chip_gen: v7x
topology: tpu7x:2x2x1
jax: 0.10.0
libtpu: 0.0.40
codegen_flags: <defaults>
</compile_context>

<pallas_src>
import jax
import jax.numpy as jnp
from jax import lax
from jax.experimental import pallas as pl
from jax.experimental.pallas import tpu as pltpu

# ----------------------------- model sizes ----------------------------------
ROI = 16      # ROInum
B = 2         # batch
T = 8         # time steps
H = 100       # LSTM hidden / self.L
D = 64        # attention hidden / self.D
K = 1         # self.K
C = 2         # num_class

HP = 128      # H padded to lane width
DP = 128      # D padded to lane width
G4 = 4 * HP   # concatenated gates (i, f, g, o), each HP wide


# ------------------------------ fused kernel ---------------------------------
def fused_kernel(x_ref, wg_ref, bg_ref, wih_ref, whh_ref, bl_ref,
                 w1_ref, b1_ref, w2_ref, b2_ref, wc_ref, bc_ref,
                 prob_ref, att_ref):
    # ---- GCN: g[b*T+t, i] = relu(sum_j x[b,t,i,j] * w_gcn[j] + b_gcn) -------
    # x_ref: (B*T, R, R) batch-major; wg_ref: (1, 1, R); bg_ref: SMEM (1,)
    x = x_ref[...]
    g = jnp.maximum(jnp.sum(x * wg_ref[...], axis=-1) + bg_ref[0], 0.0)  # (B*T, R)

    # ---- LSTM input projection hoisted out of the recurrence (bf16 MXU) -----
    xw = jnp.dot(g.astype(jnp.bfloat16), wih_ref[...],
                 preferred_element_type=jnp.float32) + bl_ref[...]       # (B*T, 4*HP)
    xw3 = xw.reshape(B, T, G4)                                           # batch-major

    whh = whh_ref[...]                                                   # (HP, 4*HP) bf16
    h = jnp.zeros((B, HP), jnp.float32)
    c = jnp.zeros((B, HP), jnp.float32)
    hs = []
    for t in range(T):                                                   # fully unrolled
        gates = xw3[:, t, :] + jnp.dot(h.astype(jnp.bfloat16), whh,
                                       preferred_element_type=jnp.float32)  # (B, 4*HP)
        # i/f/o columns pre-scaled by 0.5 host-side: sigmoid(z)=0.5*tanh(z/2)+0.5
        tg = jnp.tanh(gates)                                             # one fused EUP op
        i_g = 0.5 * tg[:, 0 * HP:1 * HP] + 0.5
        f_g = 0.5 * tg[:, 1 * HP:2 * HP] + 0.5
        g_g = tg[:, 2 * HP:3 * HP]
        o_g = 0.5 * tg[:, 3 * HP:4 * HP] + 0.5
        c = f_g * c + i_g * g_g
        h = o_g * jnp.tanh(c)
        hs.append(h)                                                     # stays in vregs

    hs3 = jnp.stack(hs, axis=1)                                          # (B, T, HP)
    hs2 = hs3.reshape(B * T, HP)                                         # batch-major rows

    # ---- attention scores + MIL pooling -------------------------------------
    a1 = jnp.tanh(jnp.dot(hs2.astype(jnp.bfloat16), w1_ref[...],
                          preferred_element_type=jnp.float32) + b1_ref[...])  # (B*T, DP)
    scores = jnp.sum(a1.reshape(B, T, DP) * w2_ref[...], axis=-1) + b2_ref[0]  # (B, T)
    att_ref[...] = scores                                                # pre-softmax Att

    m = jnp.max(scores, axis=-1, keepdims=True)
    e = jnp.exp(scores - m)
    a = e / jnp.sum(e, axis=-1, keepdims=True)                           # softmax over T
    mvec = jnp.sum(a[:, :, None] * hs3, axis=1)                          # (B, HP)

    # ---- classifier: VPU broadcast-mul + lane reduce (no tiny MXU matmul) ---
    wc = wc_ref[...]                                                     # (C, HP)
    cols = [jnp.sum(mvec * wc[k:k + 1, :], axis=-1, keepdims=True) for k in range(C)]
    logits = jnp.concatenate(cols, axis=1) + bc_ref[...]                 # (B, C)
    lm = jnp.max(logits, axis=-1, keepdims=True)
    le = jnp.exp(logits - lm)
    prob_ref[...] = le / jnp.sum(le, axis=-1, keepdims=True)


@jax.jit
def model_forward(x, kp):
    # (B,T,R,R) -> (B*T,R,R): leading-dim collapse only (no transpose, no copy).
    xt = x.reshape(B * T, ROI, ROI)
    vmem = pl.BlockSpec(memory_space=pltpu.MemorySpace.VMEM)
    smem = pl.BlockSpec(memory_space=pltpu.MemorySpace.SMEM)
    prob, att = pl.pallas_call(
        fused_kernel,
        out_shape=(jax.ShapeDtypeStruct((B, C), jnp.float32),
                   jax.ShapeDtypeStruct((B, T), jnp.float32)),
        in_specs=[vmem, vmem, smem, vmem, vmem, vmem,
                  vmem, vmem, vmem, smem, vmem, vmem],
        out_specs=(vmem, vmem),
        compiler_params=pltpu.CompilerParams(vmem_limit_bytes=4 * 1024 * 1024),
    )(xt, kp["wg"], kp["bg"], kp["wih"], kp["whh"], kp["bl"],
      kp["w1"], kp["b1"], kp["w2"], kp["b2"], kp["wc"], kp["bc"])
    Y_prob = prob
    Att = att[:, None, :]                                                # (B, 1, T)
    return Y_prob, Att


# ----------------------- pure-JAX reference (sanity) -------------------------
def model_forward_ref(x, p):
    adj = x.reshape(B * T * ROI, ROI)
    g = jnp.maximum(adj @ p["W_gcn"].T + p["b_gcn"], 0.0)                # (BTR, 1)
    seq = g.reshape(B, T, ROI)

    Wih, Whh = p["W_ih"], p["W_hh"]
    bb = p["b_ih"] + p["b_hh"]

    def cell(carry, x_t):
        h, c = carry
        zz = x_t @ Wih.T + h @ Whh.T + bb                                # (B, 4H)
        i_g = jax.nn.sigmoid(zz[:, 0:H])
        f_g = jax.nn.sigmoid(zz[:, H:2 * H])
        g_g = jnp.tanh(zz[:, 2 * H:3 * H])
        o_g = jax.nn.sigmoid(zz[:, 3 * H:4 * H])
        c = f_g * c + i_g * g_g
        h = o_g * jnp.tanh(c)
        return (h, c), h

    h0 = jnp.zeros((B, H), jnp.float32)
    c0 = jnp.zeros((B, H), jnp.float32)
    _, hs = lax.scan(cell, (h0, c0), jnp.transpose(seq, (1, 0, 2)))
    out = jnp.transpose(hs, (1, 0, 2))                                   # (B, T, H)

    a1 = jnp.tanh(out @ p["W1"].T + p["b1"])                             # (B, T, D)
    sc = a1 @ p["W2"].T + p["b2"]                                        # (B, T, 1)
    Att = jnp.transpose(sc, (0, 2, 1))                                   # (B, 1, T)
    A = jax.nn.softmax(Att, axis=2)
    M = jnp.matmul(A, out).reshape(B, H)
    Y = jax.nn.softmax(M @ p["Wc"].T + p["bc"], axis=1)
    return Y, Att


# ------------------------------ parameter init -------------------------------
def make_raw_params(key):
    ks = jax.random.split(key, 12)

    def init(k, shape, scale=0.1):
        return scale * jax.random.normal(k, shape, dtype=jnp.float32)

    return {
        "W_gcn": init(ks[0], (1, ROI)), "b_gcn": init(ks[1], (1,)),
        "W_ih": init(ks[2], (4 * H, ROI)), "W_hh": init(ks[3], (4 * H, H)),
        "b_ih": init(ks[4], (4 * H,)), "b_hh": init(ks[5], (4 * H,)),
        "W1": init(ks[6], (D, H)), "b1": init(ks[7], (D,)),
        "W2": init(ks[8], (K, D)), "b2": init(ks[9], (K,)),
        "Wc": init(ks[10], (C, H)), "bc": init(ks[11], (C,)),
    }


def prepare_kernel_params(p):
    """Concatenate LSTM gates, zero-pad H->HP / D->DP (lane-dense layouts),
    pre-scale sigmoid-gate columns by 0.5 (single-tanh gate fusion), and cast
    MXU weights to bf16 (f32 accumulation in-kernel)."""
    b_lstm = p["b_ih"] + p["b_hh"]
    wih = jnp.zeros((ROI, G4), jnp.float32)
    whh = jnp.zeros((HP, G4), jnp.float32)
    bl = jnp.zeros((1, G4), jnp.float32)
    scales = (0.5, 0.5, 1.0, 0.5)                        # gate order i, f, g, o
    for k in range(4):
        s = scales[k]
        wih = wih.at[:, k * HP:k * HP + H].set(s * p["W_ih"][k * H:(k + 1) * H, :].T)
        whh = whh.at[:H, k * HP:k * HP + H].set(s * p["W_hh"][k * H:(k + 1) * H, :].T)
        bl = bl.at[0, k * HP:k * HP + H].set(s * b_lstm[k * H:(k + 1) * H])

    w1 = jnp.zeros((HP, DP), jnp.float32).at[:H, :D].set(p["W1"].T)
    b1 = jnp.zeros((1, DP), jnp.float32).at[0, :D].set(p["b1"])
    w2 = jnp.zeros((1, 1, DP), jnp.float32).at[0, 0, :D].set(p["W2"][0])
    wc = jnp.zeros((C, HP), jnp.float32).at[:, :H].set(p["Wc"])

    return {
        "wg": p["W_gcn"].reshape(1, 1, ROI),             # (1, 1, R) f32 (VPU)
        "bg": p["b_gcn"],                                # (1,) SMEM scalar
        "wih": wih.astype(jnp.bfloat16),                 # (R, 4HP)  bf16 MXU
        "whh": whh.astype(jnp.bfloat16),                 # (HP, 4HP) bf16 MXU
        "bl": bl,                                        # (1, 4HP)  f32
        "w1": w1.astype(jnp.bfloat16),                   # (HP, DP)  bf16 MXU
        "b1": b1,                                        # (1, DP)   f32
        "w2": w2, "b2": p["b2"],                         # (1,1,DP) f32, (1,) SMEM
        "wc": wc, "bc": p["bc"].reshape(1, C),           # (C,HP) f32 (VPU), (1,C)
    }


if __name__ == "__main__":
    key = jax.random.PRNGKey(0)
    k_x, k_p = jax.random.split(key)
    x = jax.random.normal(k_x, (B, T, ROI, ROI), dtype=jnp.float32)
    raw = make_raw_params(k_p)
    kp = prepare_kernel_params(raw)

    Y_prob, Att = model_forward(x, kp)
    (Y_prob, Att) = jax.block_until_ready((Y_prob, Att))

    assert Y_prob.shape == (B, C)
    assert Att.shape == (B, 1, T)

    Y_ref, Att_ref = model_forward_ref(x, raw)
    # bf16 MXU operands (f32 accumulation) perturb results at the ~1e-3 level;
    # 2e-2 still catches any structural/semantic error.
    assert jnp.allclose(Y_prob, Y_ref, atol=2e-2, rtol=2e-2)
    assert jnp.allclose(Att, Att_ref, atol=2e-2, rtol=2e-2)
    assert jnp.allclose(jnp.sum(Y_prob, axis=1), 1.0, atol=1e-4)

    print("KERNEL_OK")
</pallas_src>

<mosaic_0001>
module attributes {stable_mosaic.version = 11 : i64} {
  func.func @fused_kernel(%arg0: memref<16x16x16xf32, #tpu.memory_space<vmem>>, %arg1: memref<1x1x16xf32, #tpu.memory_space<vmem>>, %arg2: memref<1xf32, #tpu.memory_space<smem>>, %arg3: memref<16x512xbf16, #tpu.memory_space<vmem>>, %arg4: memref<128x512xbf16, #tpu.memory_space<vmem>>, %arg5: memref<1x512xf32, #tpu.memory_space<vmem>>, %arg6: memref<128x128xbf16, #tpu.memory_space<vmem>>, %arg7: memref<1x128xf32, #tpu.memory_space<vmem>>, %arg8: memref<1x1x128xf32, #tpu.memory_space<vmem>>, %arg9: memref<1xf32, #tpu.memory_space<smem>>, %arg10: memref<2x128xf32, #tpu.memory_space<vmem>>, %arg11: memref<1x2xf32, #tpu.memory_space<vmem>>, %arg12: memref<2x2xf32, #tpu.memory_space<vmem>>, %arg13: memref<2x8xf32, #tpu.memory_space<vmem>>) attributes {dimension_semantics = [], scalar_prefetch = 0 : i64, scratch_operands = 0 : i64, tpu.core_type = #tpu.core_type<tc>} {
    %c0 = arith.constant 0 : index
    %c0_0 = arith.constant 0 : index
    %c0_1 = arith.constant 0 : index
    %0 = vector.load %arg0[%c0, %c0_0, %c0_1] : memref<16x16x16xf32, #tpu.memory_space<vmem>>, vector<16x16x16xf32>
    %c0_2 = arith.constant 0 : index
    %c0_3 = arith.constant 0 : index
    %c0_4 = arith.constant 0 : index
    %1 = vector.load %arg1[%c0_2, %c0_3, %c0_4] : memref<1x1x16xf32, #tpu.memory_space<vmem>>, vector<1x1x16xf32>
    %2 = vector.broadcast %1 : vector<1x1x16xf32> to vector<16x16x16xf32>
    %3 = arith.mulf %0, %2 : vector<16x16x16xf32>
    %cst = arith.constant dense<0.000000e+00> : vector<16x16xf32>
    %4 = vector.multi_reduction <add>, %3, %cst [2] : vector<16x16x16xf32> to vector<16x16xf32>
    %c0_5 = arith.constant 0 : index
    %5 = memref.load %arg2[%c0_5] : memref<1xf32, #tpu.memory_space<smem>>
    %6 = vector.broadcast %5 : f32 to vector<16x16xf32>
    %7 = arith.addf %4, %6 : vector<16x16xf32>
    %cst_6 = arith.constant 0.000000e+00 : f32
    %8 = vector.broadcast %cst_6 : f32 to vector<16x16xf32>
    %9 = arith.maximumf %7, %8 : vector<16x16xf32>
    %10 = arith.truncf %9 : vector<16x16xf32> to vector<16x16xbf16>
    %c0_7 = arith.constant 0 : index
    %c0_8 = arith.constant 0 : index
    %11 = vector.load %arg3[%c0_7, %c0_8] : memref<16x512xbf16, #tpu.memory_space<vmem>>, vector<16x512xbf16>
    %cst_9 = arith.constant dense<0.000000e+00> : vector<16x512xf32>
    %12 = tpu.matmul %10, %11, %cst_9 {dimension_numbers = #tpu.dot_dimension_numbers<[1], [0], [0], [1], [0, 0, 1, 1], [], []>} : vector<16x16xbf16>, vector<16x512xbf16>, vector<16x512xf32> -> vector<16x512xf32>
    %c0_10 = arith.constant 0 : index
    %c0_11 = arith.constant 0 : index
    %13 = vector.load %arg5[%c0_10, %c0_11] : memref<1x512xf32, #tpu.memory_space<vmem>>, vector<1x512xf32>
    %14 = vector.broadcast %13 : vector<1x512xf32> to vector<16x512xf32>
    %15 = arith.addf %12, %14 : vector<16x512xf32>
    %16 = vector.shape_cast %15 : vector<16x512xf32> to vector<2x8x512xf32>
    %c0_12 = arith.constant 0 : index
    %c0_13 = arith.constant 0 : index
    %17 = vector.load %arg4[%c0_12, %c0_13] : memref<128x512xbf16, #tpu.memory_space<vmem>>, vector<128x512xbf16>
    %cst_14 = arith.constant 0.000000e+00 : f32
    %18 = vector.broadcast %cst_14 : f32 to vector<2x128xf32>
    %cst_15 = arith.constant 0.000000e+00 : f32
    %19 = vector.broadcast %cst_15 : f32 to vector<2x128xf32>
    %20 = vector.extract_strided_slice %16 {offsets = [0, 0, 0], sizes = [2, 1, 512], strides = [1, 1, 1]} : vector<2x8x512xf32> to vector<2x1x512xf32>
    %21 = vector.shape_cast %20 : vector<2x1x512xf32> to vector<2x512xf32>
    %22 = arith.truncf %18 : vector<2x128xf32> to vector<2x128xbf16>
    %cst_16 = arith.constant dense<0.000000e+00> : vector<2x512xf32>
    %23 = tpu.matmul %22, %17, %cst_16 {dimension_numbers = #tpu.dot_dimension_numbers<[1], [0], [0], [1], [0, 0, 1, 1], [], []>} : vector<2x128xbf16>, vector<128x512xbf16>, vector<2x512xf32> -> vector<2x512xf32>
    %24 = arith.addf %21, %23 : vector<2x512xf32>
    %25 = math.tanh %24 : vector<2x512xf32>
    %26 = vector.extract_strided_slice %25 {offsets = [0, 0], sizes = [2, 128], strides = [1, 1]} : vector<2x512xf32> to vector<2x128xf32>
    %cst_17 = arith.constant 5.000000e-01 : f32
    %27 = vector.broadcast %cst_17 : f32 to vector<2x128xf32>
    %28 = arith.mulf %27, %26 : vector<2x128xf32>
    %cst_18 = arith.constant 5.000000e-01 : f32
    %29 = vector.broadcast %cst_18 : f32 to vector<2x128xf32>
    %30 = arith.addf %28, %29 : vector<2x128xf32>
    %31 = vector.extract_strided_slice %25 {offsets = [0, 128], sizes = [2, 128], strides = [1, 1]} : vector<2x512xf32> to vector<2x128xf32>
    %cst_19 = arith.constant 5.000000e-01 : f32
    %32 = vector.broadcast %cst_19 : f32 to vector<2x128xf32>
    %33 = arith.mulf %32, %31 : vector<2x128xf32>
    %cst_20 = arith.constant 5.000000e-01 : f32
    %34 = vector.broadcast %cst_20 : f32 to vector<2x128xf32>
    %35 = arith.addf %33, %34 : vector<2x128xf32>
    %36 = vector.extract_strided_slice %25 {offsets = [0, 256], sizes = [2, 128], strides = [1, 1]} : vector<2x512xf32> to vector<2x128xf32>
    %37 = vector.extract_strided_slice %25 {offsets = [0, 384], sizes = [2, 128], strides = [1, 1]} : vector<2x512xf32> to vector<2x128xf32>
    %cst_21 = arith.constant 5.000000e-01 : f32
    %38 = vector.broadcast %cst_21 : f32 to vector<2x128xf32>
    %39 = arith.mulf %38, %37 : vector<2x128xf32>
    %cst_22 = arith.constant 5.000000e-01 : f32
    %40 = vector.broadcast %cst_22 : f32 to vector<2x128xf32>
    %41 = arith.addf %39, %40 : vector<2x128xf32>
    %42 = arith.mulf %35, %19 : vector<2x128xf32>
    %43 = arith.mulf %30, %36 : vector<2x128xf32>
    %44 = arith.addf %42, %43 : vector<2x128xf32>
    %45 = math.tanh %44 : vector<2x128xf32>
    %46 = arith.mulf %41, %45 : vector<2x128xf32>
    %47 = vector.extract_strided_slice %16 {offsets = [0, 1, 0], sizes = [2, 1, 512], strides = [1, 1, 1]} : vector<2x8x512xf32> to vector<2x1x512xf32>
    %48 = vector.shape_cast %47 : vector<2x1x512xf32> to vector<2x512xf32>
    %49 = arith.truncf %46 : vector<2x128xf32> to vector<2x128xbf16>
    %cst_23 = arith.constant dense<0.000000e+00> : vector<2x512xf32>
    %50 = tpu.matmul %49, %17, %cst_23 {dimension_numbers = #tpu.dot_dimension_numbers<[1], [0], [0], [1], [0, 0, 1, 1], [], []>} : vector<2x128xbf16>, vector<128x512xbf16>, vector<2x512xf32> -> vector<2x512xf32>
    %51 = arith.addf %48, %50 : vector<2x512xf32>
    %52 = math.tanh %51 : vector<2x512xf32>
    %53 = vector.extract_strided_slice %52 {offsets = [0, 0], sizes = [2, 128], strides = [1, 1]} : vector<2x512xf32> to vector<2x128xf32>
    %cst_24 = arith.constant 5.000000e-01 : f32
    %54 = vector.broadcast %cst_24 : f32 to vector<2x128xf32>
    %55 = arith.mulf %54, %53 : vector<2x128xf32>
    %cst_25 = arith.constant 5.000000e-01 : f32
    %56 = vector.broadcast %cst_25 : f32 to vector<2x128xf32>
    %57 = arith.addf %55, %56 : vector<2x128xf32>
    %58 = vector.extract_strided_slice %52 {offsets = [0, 128], sizes = [2, 128], strides = [1, 1]} : vector<2x512xf32> to vector<2x128xf32>
    %cst_26 = arith.constant 5.000000e-01 : f32
    %59 = vector.broadcast %cst_26 : f32 to vector<2x128xf32>
    %60 = arith.mulf %59, %58 : vector<2x128xf32>
    %cst_27 = arith.constant 5.000000e-01 : f32
    %61 = vector.broadcast %cst_27 : f32 to vector<2x128xf32>
    %62 = arith.addf %60, %61 : vector<2x128xf32>
    %63 = vector.extract_strided_slice %52 {offsets = [0, 256], sizes = [2, 128], strides = [1, 1]} : vector<2x512xf32> to vector<2x128xf32>
    %64 = vector.extract_strided_slice %52 {offsets = [0, 384], sizes = [2, 128], strides = [1, 1]} : vector<2x512xf32> to vector<2x128xf32>
    %cst_28 = arith.constant 5.000000e-01 : f32
    %65 = vector.broadcast %cst_28 : f32 to vector<2x128xf32>
    %66 = arith.mulf %65, %64 : vector<2x128xf32>
    %cst_29 = arith.constant 5.000000e-01 : f32
    %67 = vector.broadcast %cst_29 : f32 to vector<2x128xf32>
    %68 = arith.addf %66, %67 : vector<2x128xf32>
    %69 = arith.mulf %62, %44 : vector<2x128xf32>
    %70 = arith.mulf %57, %63 : vector<2x128xf32>
    %71 = arith.addf %69, %70 : vector<2x128xf32>
    %72 = math.tanh %71 : vector<2x128xf32>
    %73 = arith.mulf %68, %72 : vector<2x128xf32>
    %74 = vector.extract_strided_slice %16 {offsets = [0, 2, 0], sizes = [2, 1, 512], strides = [1, 1, 1]} : vector<2x8x512xf32> to vector<2x1x512xf32>
    %75 = vector.shape_cast %74 : vector<2x1x512xf32> to vector<2x512xf32>
    %76 = arith.truncf %73 : vector<2x128xf32> to vector<2x128xbf16>
    %cst_30 = arith.constant dense<0.000000e+00> : vector<2x512xf32>
    %77 = tpu.matmul %76, %17, %cst_30 {dimension_numbers = #tpu.dot_dimension_numbers<[1], [0], [0], [1], [0, 0, 1, 1], [], []>} : vector<2x128xbf16>, vector<128x512xbf16>, vector<2x512xf32> -> vector<2x512xf32>
    %78 = arith.addf %75, %77 : vector<2x512xf32>
    %79 = math.tanh %78 : vector<2x512xf32>
    %80 = vector.extract_strided_slice %79 {offsets = [0, 0], sizes = [2, 128], strides = [1, 1]} : vector<2x512xf32> to vector<2x128xf32>
    %cst_31 = arith.constant 5.000000e-01 : f32
    %81 = vector.broadcast %cst_31 : f32 to vector<2x128xf32>
    %82 = arith.mulf %81, %80 : vector<2x128xf32>
    %cst_32 = arith.constant 5.000000e-01 : f32
    %83 = vector.broadcast %cst_32 : f32 to vector<2x128xf32>
    %84 = arith.addf %82, %83 : vector<2x128xf32>
    %85 = vector.extract_strided_slice %79 {offsets = [0, 128], sizes = [2, 128], strides = [1, 1]} : vector<2x512xf32> to vector<2x128xf32>
    %cst_33 = arith.constant 5.000000e-01 : f32
    %86 = vector.broadcast %cst_33 : f32 to vector<2x128xf32>
    %87 = arith.mulf %86, %85 : vector<2x128xf32>
    %cst_34 = arith.constant 5.000000e-01 : f32
    %88 = vector.broadcast %cst_34 : f32 to vector<2x128xf32>
    %89 = arith.addf %87, %88 : vector<2x128xf32>
    %90 = vector.extract_strided_slice %79 {offsets = [0, 256], sizes = [2, 128], strides = [1, 1]} : vector<2x512xf32> to vector<2x128xf32>
    %91 = vector.extract_strided_slice %79 {offsets = [0, 384], sizes = [2, 128], strides = [1, 1]} : vector<2x512xf32> to vector<2x128xf32>
    %cst_35 = arith.constant 5.000000e-01 : f32
    %92 = vector.broadcast %cst_35 : f32 to vector<2x128xf32>
    %93 = arith.mulf %92, %91 : vector<2x128xf32>
    %cst_36 = arith.constant 5.000000e-01 : f32
    %94 = vector.broadcast %cst_36 : f32 to vector<2x128xf32>
    %95 = arith.addf %93, %94 : vector<2x128xf32>
    %96 = arith.mulf %89, %71 : vector<2x128xf32>
    %97 = arith.mulf %84, %90 : vector<2x128xf32>
    %98 = arith.addf %96, %97 : vector<2x128xf32>
    %99 = math.tanh %98 : vector<2x128xf32>
    %100 = arith.mulf %95, %99 : vector<2x128xf32>
    %101 = vector.extract_strided_slice %16 {offsets = [0, 3, 0], sizes = [2, 1, 512], strides = [1, 1, 1]} : vector<2x8x512xf32> to vector<2x1x512xf32>
    %102 = vector.shape_cast %101 : vector<2x1x512xf32> to vector<2x512xf32>
    %103 = arith.truncf %100 : vector<2x128xf32> to vector<2x128xbf16>
    %cst_37 = arith.constant dense<0.000000e+00> : vector<2x512xf32>
    %104 = tpu.matmul %103, %17, %cst_37 {dimension_numbers = #tpu.dot_dimension_numbers<[1], [0], [0], [1], [0, 0, 1, 1], [], []>} : vector<2x128xbf16>, vector<128x512xbf16>, vector<2x512xf32> -> vector<2x512xf32>
    %105 = arith.addf %102, %104 : vector<2x512xf32>
    %106 = math.tanh %105 : vector<2x512xf32>
    %107 = vector.extract_strided_slice %106 {offsets = [0, 0], sizes = [2, 128], strides = [1, 1]} : vector<2x512xf32> to vector<2x128xf32>
    %cst_38 = arith.constant 5.000000e-01 : f32
    %108 = vector.broadcast %cst_38 : f32 to vector<2x128xf32>
    %109 = arith.mulf %108, %107 : vector<2x128xf32>
    %cst_39 = arith.constant 5.000000e-01 : f32
    %110 = vector.broadcast %cst_39 : f32 to vector<2x128xf32>
    %111 = arith.addf %109, %110 : vector<2x128xf32>
    %112 = vector.extract_strided_slice %106 {offsets = [0, 128], sizes = [2, 128], strides = [1, 1]} : vector<2x512xf32> to vector<2x128xf32>
    %cst_40 = arith.constant 5.000000e-01 : f32
    %113 = vector.broadcast %cst_40 : f32 to vector<2x128xf32>
    %114 = arith.mulf %113, %112 : vector<2x128xf32>
    %cst_41 = arith.constant 5.000000e-01 : f32
    %115 = vector.broadcast %cst_41 : f32 to vector<2x128xf32>
    %116 = arith.addf %114, %115 : vector<2x128xf32>
    %117 = vector.extract_strided_slice %106 {offsets = [0, 256], sizes = [2, 128], strides = [1, 1]} : vector<2x512xf32> to vector<2x128xf32>
    %118 = vector.extract_strided_slice %106 {offsets = [0, 384], sizes = [2, 128], strides = [1, 1]} : vector<2x512xf32> to vector<2x128xf32>
    %cst_42 = arith.constant 5.000000e-01 : f32
    %119 = vector.broadcast %cst_42 : f32 to vector<2x128xf32>
    %120 = arith.mulf %119, %118 : vector<2x128xf32>
    %cst_43 = arith.constant 5.000000e-01 : f32
    %121 = vector.broadcast %cst_43 : f32 to vector<2x128xf32>
    %122 = arith.addf %120, %121 : vector<2x128xf32>
    %123 = arith.mulf %116, %98 : vector<2x128xf32>
    %124 = arith.mulf %111, %117 : vector<2x128xf32>
    %125 = arith.addf %123, %124 : vector<2x128xf32>
    %126 = math.tanh %125 : vector<2x128xf32>
    %127 = arith.mulf %122, %126 : vector<2x128xf32>
    %128 = vector.extract_strided_slice %16 {offsets = [0, 4, 0], sizes = [2, 1, 512], strides = [1, 1, 1]} : vector<2x8x512xf32> to vector<2x1x512xf32>
    %129 = vector.shape_cast %128 : vector<2x1x512xf32> to vector<2x512xf32>
    %130 = arith.truncf %127 : vector<2x128xf32> to vector<2x128xbf16>
    %cst_44 = arith.constant dense<0.000000e+00> : vector<2x512xf32>
    %131 = tpu.matmul %130, %17, %cst_44 {dimension_numbers = #tpu.dot_dimension_numbers<[1], [0], [0], [1], [0, 0, 1, 1], [], []>} : vector<2x128xbf16>, vector<128x512xbf16>, vector<2x512xf32> -> vector<2x512xf32>
    %132 = arith.addf %129, %131 : vector<2x512xf32>
    %133 = math.tanh %132 : vector<2x512xf32>
    %134 = vector.extract_strided_slice %133 {offsets = [0, 0], sizes = [2, 128], strides = [1, 1]} : vector<2x512xf32> to vector<2x128xf32>
    %cst_45 = arith.constant 5.000000e-01 : f32
    %135 = vector.broadcast %cst_45 : f32 to vector<2x128xf32>
    %136 = arith.mulf %135, %134 : vector<2x128xf32>
    %cst_46 = arith.constant 5.000000e-01 : f32
    %137 = vector.broadcast %cst_46 : f32 to vector<2x128xf32>
    %138 = arith.addf %136, %137 : vector<2x128xf32>
    %139 = vector.extract_strided_slice %133 {offsets = [0, 128], sizes = [2, 128], strides = [1, 1]} : vector<2x512xf32> to vector<2x128xf32>
    %cst_47 = arith.constant 5.000000e-01 : f32
    %140 = vector.broadcast %cst_47 : f32 to vector<2x128xf32>
    %141 = arith.mulf %140, %139 : vector<2x128xf32>
    %cst_48 = arith.constant 5.000000e-01 : f32
    %142 = vector.broadcast %cst_48 : f32 to vector<2x128xf32>
    %143 = arith.addf %141, %142 : vector<2x128xf32>
    %144 = vector.extract_strided_slice %133 {offsets = [0, 256], sizes = [2, 128], strides = [1, 1]} : vector<2x512xf32> to vector<2x128xf32>
    %145 = vector.extract_strided_slice %133 {offsets = [0, 384], sizes = [2, 128], strides = [1, 1]} : vector<2x512xf32> to vector<2x128xf32>
    %cst_49 = arith.constant 5.000000e-01 : f32
    %146 = vector.broadcast %cst_49 : f32 to vector<2x128xf32>
    %147 = arith.mulf %146, %145 : vector<2x128xf32>
    %cst_50 = arith.constant 5.000000e-01 : f32
    %148 = vector.broadcast %cst_50 : f32 to vector<2x128xf32>
    %149 = arith.addf %147, %148 : vector<2x128xf32>
    %150 = arith.mulf %143, %125 : vector<2x128xf32>
    %151 = arith.mulf %138, %144 : vector<2x128xf32>
    %152 = arith.addf %150, %151 : vector<2x128xf32>
    %153 = math.tanh %152 : vector<2x128xf32>
    %154 = arith.mulf %149, %153 : vector<2x128xf32>
    %155 = vector.extract_strided_slice %16 {offsets = [0, 5, 0], sizes = [2, 1, 512], strides = [1, 1, 1]} : vector<2x8x512xf32> to vector<2x1x512xf32>
    %156 = vector.shape_cast %155 : vector<2x1x512xf32> to vector<2x512xf32>
    %157 = arith.truncf %154 : vector<2x128xf32> to vector<2x128xbf16>
    %cst_51 = arith.constant dense<0.000000e+00> : vector<2x512xf32>
    %158 = tpu.matmul %157, %17, %cst_51 {dimension_numbers = #tpu.dot_dimension_numbers<[1], [0], [0], [1], [0, 0, 1, 1], [], []>} : vector<2x128xbf16>, vector<128x512xbf16>, vector<2x512xf32> -> vector<2x512xf32>
    %159 = arith.addf %156, %158 : vector<2x512xf32>
    %160 = math.tanh %159 : vector<2x512xf32>
    %161 = vector.extract_strided_slice %160 {offsets = [0, 0], sizes = [2, 128], strides = [1, 1]} : vector<2x512xf32> to vector<2x128xf32>
    %cst_52 = arith.constant 5.000000e-01 : f32
    %162 = vector.broadcast %cst_52 : f32 to vector<2x128xf32>
    %163 = arith.mulf %162, %161 : vector<2x128xf32>
    %cst_53 = arith.constant 5.000000e-01 : f32
    %164 = vector.broadcast %cst_53 : f32 to vector<2x128xf32>
    %165 = arith.addf %163, %164 : vector<2x128xf32>
    %166 = vector.extract_strided_slice %160 {offsets = [0, 128], sizes = [2, 128], strides = [1, 1]} : vector<2x512xf32> to vector<2x128xf32>
    %cst_54 = arith.constant 5.000000e-01 : f32
    %167 = vector.broadcast %cst_54 : f32 to vector<2x128xf32>
    %168 = arith.mulf %167, %166 : vector<2x128xf32>
    %cst_55 = arith.constant 5.000000e-01 : f32
    %169 = vector.broadcast %cst_55 : f32 to vector<2x128xf32>
    %170 = arith.addf %168, %169 : vector<2x128xf32>
    %171 = vector.extract_strided_slice %160 {offsets = [0, 256], sizes = [2, 128], strides = [1, 1]} : vector<2x512xf32> to vector<2x128xf32>
    %172 = vector.extract_strided_slice %160 {offsets = [0, 384], sizes = [2, 128], strides = [1, 1]} : vector<2x512xf32> to vector<2x128xf32>
    %cst_56 = arith.constant 5.000000e-01 : f32
    %173 = vector.broadcast %cst_56 : f32 to vector<2x128xf32>
    %174 = arith.mulf %173, %172 : vector<2x128xf32>
    %cst_57 = arith.constant 5.000000e-01 : f32
    %175 = vector.broadcast %cst_57 : f32 to vector<2x128xf32>
    %176 = arith.addf %174, %175 : vector<2x128xf32>
    %177 = arith.mulf %170, %152 : vector<2x128xf32>
    %178 = arith.mulf %165, %171 : vector<2x128xf32>
    %179 = arith.addf %177, %178 : vector<2x128xf32>
    %180 = math.tanh %179 : vector<2x128xf32>
    %181 = arith.mulf %176, %180 : vector<2x128xf32>
    %182 = vector.extract_strided_slice %16 {offsets = [0, 6, 0], sizes = [2, 1, 512], strides = [1, 1, 1]} : vector<2x8x512xf32> to vector<2x1x512xf32>
    %183 = vector.shape_cast %182 : vector<2x1x512xf32> to vector<2x512xf32>
    %184 = arith.truncf %181 : vector<2x128xf32> to vector<2x128xbf16>
    %cst_58 = arith.constant dense<0.000000e+00> : vector<2x512xf32>
    %185 = tpu.matmul %184, %17, %cst_58 {dimension_numbers = #tpu.dot_dimension_numbers<[1], [0], [0], [1], [0, 0, 1, 1], [], []>} : vector<2x128xbf16>, vector<128x512xbf16>, vector<2x512xf32> -> vector<2x512xf32>
    %186 = arith.addf %183, %185 : vector<2x512xf32>
    %187 = math.tanh %186 : vector<2x512xf32>
    %188 = vector.extract_strided_slice %187 {offsets = [0, 0], sizes = [2, 128], strides = [1, 1]} : vector<2x512xf32> to vector<2x128xf32>
    %cst_59 = arith.constant 5.000000e-01 : f32
    %189 = vector.broadcast %cst_59 : f32 to vector<2x128xf32>
    %190 = arith.mulf %189, %188 : vector<2x128xf32>
    %cst_60 = arith.constant 5.000000e-01 : f32
    %191 = vector.broadcast %cst_60 : f32 to vector<2x128xf32>
    %192 = arith.addf %190, %191 : vector<2x128xf32>
    %193 = vector.extract_strided_slice %187 {offsets = [0, 128], sizes = [2, 128], strides = [1, 1]} : vector<2x512xf32> to vector<2x128xf32>
    %cst_61 = arith.constant 5.000000e-01 : f32
    %194 = vector.broadcast %cst_61 : f32 to vector<2x128xf32>
    %195 = arith.mulf %194, %193 : vector<2x128xf32>
    %cst_62 = arith.constant 5.000000e-01 : f32
    %196 = vector.broadcast %cst_62 : f32 to vector<2x128xf32>
    %197 = arith.addf %195, %196 : vector<2x128xf32>
    %198 = vector.extract_strided_slice %187 {offsets = [0, 256], sizes = [2, 128], strides = [1, 1]} : vector<2x512xf32> to vector<2x128xf32>
    %199 = vector.extract_strided_slice %187 {offsets = [0, 384], sizes = [2, 128], strides = [1, 1]} : vector<2x512xf32> to vector<2x128xf32>
    %cst_63 = arith.constant 5.000000e-01 : f32
    %200 = vector.broadcast %cst_63 : f32 to vector<2x128xf32>
    %201 = arith.mulf %200, %199 : vector<2x128xf32>
    %cst_64 = arith.constant 5.000000e-01 : f32
    %202 = vector.broadcast %cst_64 : f32 to vector<2x128xf32>
    %203 = arith.addf %201, %202 : vector<2x128xf32>
    %204 = arith.mulf %197, %179 : vector<2x128xf32>
    %205 = arith.mulf %192, %198 : vector<2x128xf32>
    %206 = arith.addf %204, %205 : vector<2x128xf32>
    %207 = math.tanh %206 : vector<2x128xf32>
    %208 = arith.mulf %203, %207 : vector<2x128xf32>
    %209 = vector.extract_strided_slice %16 {offsets = [0, 7, 0], sizes = [2, 1, 512], strides = [1, 1, 1]} : vector<2x8x512xf32> to vector<2x1x512xf32>
    %210 = vector.shape_cast %209 : vector<2x1x512xf32> to vector<2x512xf32>
    %211 = arith.truncf %208 : vector<2x128xf32> to vector<2x128xbf16>
    %cst_65 = arith.constant dense<0.000000e+00> : vector<2x512xf32>
    %212 = tpu.matmul %211, %17, %cst_65 {dimension_numbers = #tpu.dot_dimension_numbers<[1], [0], [0], [1], [0, 0, 1, 1], [], []>} : vector<2x128xbf16>, vector<128x512xbf16>, vector<2x512xf32> -> vector<2x512xf32>
    %213 = arith.addf %210, %212 : vector<2x512xf32>
    %214 = math.tanh %213 : vector<2x512xf32>
    %215 = vector.extract_strided_slice %214 {offsets = [0, 0], sizes = [2, 128], strides = [1, 1]} : vector<2x512xf32> to vector<2x128xf32>
    %cst_66 = arith.constant 5.000000e-01 : f32
    %216 = vector.broadcast %cst_66 : f32 to vector<2x128xf32>
    %217 = arith.mulf %216, %215 : vector<2x128xf32>
    %cst_67 = arith.constant 5.000000e-01 : f32
    %218 = vector.broadcast %cst_67 : f32 to vector<2x128xf32>
    %219 = arith.addf %217, %218 : vector<2x128xf32>
    %220 = vector.extract_strided_slice %214 {offsets = [0, 128], sizes = [2, 128], strides = [1, 1]} : vector<2x512xf32> to vector<2x128xf32>
    %cst_68 = arith.constant 5.000000e-01 : f32
    %221 = vector.broadcast %cst_68 : f32 to vector<2x128xf32>
    %222 = arith.mulf %221, %220 : vector<2x128xf32>
    %cst_69 = arith.constant 5.000000e-01 : f32
    %223 = vector.broadcast %cst_69 : f32 to vector<2x128xf32>
    %224 = arith.addf %222, %223 : vector<2x128xf32>
    %225 = vector.extract_strided_slice %214 {offsets = [0, 256], sizes = [2, 128], strides = [1, 1]} : vector<2x512xf32> to vector<2x128xf32>
    %226 = vector.extract_strided_slice %214 {offsets = [0, 384], sizes = [2, 128], strides = [1, 1]} : vector<2x512xf32> to vector<2x128xf32>
    %cst_70 = arith.constant 5.000000e-01 : f32
    %227 = vector.broadcast %cst_70 : f32 to vector<2x128xf32>
    %228 = arith.mulf %227, %226 : vector<2x128xf32>
    %cst_71 = arith.constant 5.000000e-01 : f32
    %229 = vector.broadcast %cst_71 : f32 to vector<2x128xf32>
    %230 = arith.addf %228, %229 : vector<2x128xf32>
    %231 = arith.mulf %224, %206 : vector<2x128xf32>
    %232 = arith.mulf %219, %225 : vector<2x128xf32>
    %233 = arith.addf %231, %232 : vector<2x128xf32>
    %234 = math.tanh %233 : vector<2x128xf32>
    %235 = arith.mulf %230, %234 : vector<2x128xf32>
    %236 = vector.shape_cast %46 : vector<2x128xf32> to vector<2x1x128xf32>
    %237 = vector.shape_cast %73 : vector<2x128xf32> to vector<2x1x128xf32>
    %238 = vector.shape_cast %100 : vector<2x128xf32> to vector<2x1x128xf32>
    %239 = vector.shape_cast %127 : vector<2x128xf32> to vector<2x1x128xf32>
    %240 = vector.shape_cast %154 : vector<2x128xf32> to vector<2x1x128xf32>
    %241 = vector.shape_cast %181 : vector<2x128xf32> to vector<2x1x128xf32>
    %242 = vector.shape_cast %208 : vector<2x128xf32> to vector<2x1x128xf32>
    %243 = vector.shape_cast %235 : vector<2x128xf32> to vector<2x1x128xf32>
    %244 = tpu.concatenate %236, %237, %238, %239, %240, %241, %242, %243 in 1 : vector<2x1x128xf32>, vector<2x1x128xf32>, vector<2x1x128xf32>, vector<2x1x128xf32>, vector<2x1x128xf32>, vector<2x1x128xf32>, vector<2x1x128xf32>, vector<2x1x128xf32> -> vector<2x8x128xf32>
    %245 = vector.shape_cast %244 : vector<2x8x128xf32> to vector<16x128xf32>
    %246 = arith.truncf %245 : vector<16x128xf32> to vector<16x128xbf16>
    %c0_72 = arith.constant 0 : index
    %c0_73 = arith.constant 0 : index
    %247 = vector.load %arg6[%c0_72, %c0_73] : memref<128x128xbf16, #tpu.memory_space<vmem>>, vector<128x128xbf16>
    %cst_74 = arith.constant dense<0.000000e+00> : vector<16x128xf32>
    %248 = tpu.matmul %246, %247, %cst_74 {dimension_numbers = #tpu.dot_dimension_numbers<[1], [0], [0], [1], [0, 0, 1, 1], [], []>} : vector<16x128xbf16>, vector<128x128xbf16>, vector<16x128xf32> -> vector<16x128xf32>
    %c0_75 = arith.constant 0 : index
    %c0_76 = arith.constant 0 : index
    %249 = vector.load %arg7[%c0_75, %c0_76] : memref<1x128xf32, #tpu.memory_space<vmem>>, vector<1x128xf32>
    %250 = vector.broadcast %249 : vector<1x128xf32> to vector<16x128xf32>
    %251 = arith.addf %248, %250 : vector<16x128xf32>
    %252 = math.tanh %251 : vector<16x128xf32>
    %253 = vector.shape_cast %252 : vector<16x128xf32> to vector<2x8x128xf32>
    %c0_77 = arith.constant 0 : index
    %c0_78 = arith.constant 0 : index
    %c0_79 = arith.constant 0 : index
    %254 = vector.load %arg8[%c0_77, %c0_78, %c0_79] : memref<1x1x128xf32, #tpu.memory_space<vmem>>, vector<1x1x128xf32>
    %255 = vector.broadcast %254 : vector<1x1x128xf32> to vector<2x8x128xf32>
    %256 = arith.mulf %253, %255 : vector<2x8x128xf32>
    %cst_80 = arith.constant dense<0.000000e+00> : vector<2x8xf32>
    %257 = vector.multi_reduction <add>, %256, %cst_80 [2] : vector<2x8x128xf32> to vector<2x8xf32>
    %c0_81 = arith.constant 0 : index
    %258 = memref.load %arg9[%c0_81] : memref<1xf32, #tpu.memory_space<smem>>
    %259 = vector.broadcast %258 : f32 to vector<2x8xf32>
    %260 = arith.addf %257, %259 : vector<2x8xf32>
    %c0_82 = arith.constant 0 : index
    %c0_83 = arith.constant 0 : index
    %261 = vector.load %arg13[%c0_82, %c0_83] : memref<2x8xf32, #tpu.memory_space<vmem>>, vector<2x8xf32>
    tpu.vector_store %arg13[%c0_82, %c0_83], %260 {strides = array<i32>} : memref<2x8xf32, #tpu.memory_space<vmem>>, vector<2x8xf32>,
    %cst_84 = arith.constant dense<0xFF800000> : vector<2xf32>
    %262 = vector.multi_reduction <maximumf>, %260, %cst_84 [1] : vector<2x8xf32> to vector<2xf32>
    %263 = vector.shape_cast %262 : vector<2xf32> to vector<2x1xf32>
    %264 = vector.broadcast %263 : vector<2x1xf32> to vector<2x8xf32>
    %265 = arith.subf %260, %264 : vector<2x8xf32>
    %266 = math.exp %265 : vector<2x8xf32>
    %cst_85 = arith.constant dense<0.000000e+00> : vector<2xf32>
    %267 = vector.multi_reduction <add>, %266, %cst_85 [1] : vector<2x8xf32> to vector<2xf32>
    %268 = vector.shape_cast %267 : vector<2xf32> to vector<2x1xf32>
    %269 = vector.broadcast %268 : vector<2x1xf32> to vector<2x8xf32>
    %270 = arith.divf %266, %269 : vector<2x8xf32>
    %271 = vector.shape_cast %270 : vector<2x8xf32> to vector<2x8x1xf32>
    %272 = vector.broadcast %271 : vector<2x8x1xf32> to vector<2x8x128xf32>
    %273 = arith.mulf %272, %244 : vector<2x8x128xf32>
    %cst_86 = arith.constant dense<0.000000e+00> : vector<2x128xf32>
    %274 = vector.multi_reduction <add>, %273, %cst_86 [1] : vector<2x8x128xf32> to vector<2x128xf32>
    %c0_87 = arith.constant 0 : index
    %c0_88 = arith.constant 0 : index
    %275 = vector.load %arg10[%c0_87, %c0_88] : memref<2x128xf32, #tpu.memory_space<vmem>>, vector<2x128xf32>
    %276 = vector.extract_strided_slice %275 {offsets = [0, 0], sizes = [1, 128], strides = [1, 1]} : vector<2x128xf32> to vector<1x128xf32>
    %277 = vector.broadcast %276 : vector<1x128xf32> to vector<2x128xf32>
    %278 = arith.mulf %274, %277 : vector<2x128xf32>
    %cst_89 = arith.constant dense<0.000000e+00> : vector<2xf32>
    %279 = vector.multi_reduction <add>, %278, %cst_89 [1] : vector<2x128xf32> to vector<2xf32>
    %280 = vector.shape_cast %279 : vector<2xf32> to vector<2x1xf32>
    %281 = vector.extract_strided_slice %275 {offsets = [1, 0], sizes = [1, 128], strides = [1, 1]} : vector<2x128xf32> to vector<1x128xf32>
    %282 = vector.broadcast %281 : vector<1x128xf32> to vector<2x128xf32>
    %283 = arith.mulf %274, %282 : vector<2x128xf32>
    %cst_90 = arith.constant dense<0.000000e+00> : vector<2xf32>
    %284 = vector.multi_reduction <add>, %283, %cst_90 [1] : vector<2x128xf32> to vector<2xf32>
    %285 = vector.shape_cast %284 : vector<2xf32> to vector<2x1xf32>
    %286 = tpu.concatenate %280, %285 in 1 : vector<2x1xf32>, vector<2x1xf32> -> vector<2x2xf32>
    %c0_91 = arith.constant 0 : index
    %c0_92 = arith.constant 0 : index
    %287 = vector.load %arg11[%c0_91, %c0_92] : memref<1x2xf32, #tpu.memory_space<vmem>>, vector<1x2xf32>
    %288 = vector.broadcast %287 : vector<1x2xf32> to vector<2x2xf32>
    %289 = arith.addf %286, %288 : vector<2x2xf32>
    %cst_93 = arith.constant dense<0xFF800000> : vector<2xf32>
    %290 = vector.multi_reduction <maximumf>, %289, %cst_93 [1] : vector<2x2xf32> to vector<2xf32>
    %291 = vector.shape_cast %290 : vector<2xf32> to vector<2x1xf32>
    %292 = vector.broadcast %291 : vector<2x1xf32> to vector<2x2xf32>
    %293 = arith.subf %289, %292 : vector<2x2xf32>
    %294 = math.exp %293 : vector<2x2xf32>
    %cst_94 = arith.constant dense<0.000000e+00> : vector<2xf32>
    %295 = vector.multi_reduction <add>, %294, %cst_94 [1] : vector<2x2xf32> to vector<2xf32>
    %296 = vector.shape_cast %295 : vector<2xf32> to vector<2x1xf32>
    %297 = vector.broadcast %296 : vector<2x1xf32> to vector<2x2xf32>
    %298 = arith.divf %294, %297 : vector<2x2xf32>
    %c0_95 = arith.constant 0 : index
    %c0_96 = arith.constant 0 : index
    %299 = vector.load %arg12[%c0_95, %c0_96] : memref<2x2xf32, #tpu.memory_space<vmem>>, vector<2x2xf32>
    tpu.vector_store %arg12[%c0_95, %c0_96], %298 {strides = array<i32>} : memref<2x2xf32, #tpu.memory_space<vmem>>, vector<2x2xf32>,
    return
  }
}

</mosaic_0001>

<llo_original>
// kernel: model_forward.1
$region0: #{model_forward.1}
  #allocation0 [shape = 'u32[]', space=smem, size = 0x4, offset = 0x4, fixed_abs, tag = 'smem constant byte address 0x4 - core index']
  #allocation1 [shape = 'u32[144,128]{1,0:T(1,128)}', space=vmem, size = 0x12000, scoped, tag = 'internal scratch']
  #allocation2 [shape = 'f32[1]{0:T(128)S(6)}', space=smem, size = 0x200, scoped, tag = 'scoped memory for model_forward.1']
  #allocation3 [shape = 'f32[1]{0:T(128)S(6)}', space=smem, size = 0x200, scoped, tag = 'scoped memory for model_forward.1']
  %s0 = inlined_call_operand.hbm [shape: f32[16,16,16], index: 0, kind: input, shape index: {}]
  %s1 = inlined_call_operand.vmem [shape: f32[1,1,16], index: 1, kind: input, shape index: {}]
  %s2 = inlined_call_operand.<no memory space> [shape: f32[1], index: 2, kind: input, shape index: {}]
  %s3 = inlined_call_operand.vmem [shape: bf16[16,512], index: 3, kind: input, shape index: {}]
  %s4 = inlined_call_operand.hbm [shape: bf16[128,512], index: 4, kind: input, shape index: {}]
  %s5 = inlined_call_operand.vmem [shape: f32[1,512], index: 5, kind: input, shape index: {}]
  %s6 = inlined_call_operand.hbm [shape: bf16[128,128], index: 6, kind: input, shape index: {}]
  %s7 = inlined_call_operand.vmem [shape: f32[1,128], index: 7, kind: input, shape index: {}]
  %s8 = inlined_call_operand.vmem [shape: f32[1,1,128], index: 8, kind: input, shape index: {}]
  %s9 = inlined_call_operand.<no memory space> [shape: f32[1], index: 9, kind: input, shape index: {}]
  %s10 = inlined_call_operand.vmem [shape: f32[2,128], index: 10, kind: input, shape index: {}]
  %s11 = inlined_call_operand.vmem [shape: f32[1,2], index: 11, kind: input, shape index: {}]
  %s12 = inlined_call_operand.hbm [shape: f32[2,2], index: 12, kind: output, shape index: {0}]
  %s13 = inlined_call_operand.hbm [shape: f32[2,8], index: 13, kind: output, shape index: {1}]
  %14 = xla_tuple %s12, %s13
  %s15 = sld [smem:[#allocation0]]
  $region78: #{model_forward.1} parent=0
    _
  %s17 = ssub.s32 1, %s15
  %s18 = scalar_select 0, %s17, %s15
  %19 = sst [smem:[#allocation2]] %s2
  %20 = sst [smem:[#allocation3]] %s9
  $region1: #{model_forward.1} parent=0
    #allocation4 [shape = 'u8[131072]{0}', space=vmem, size = 0x20000, scoped, tag = 'input window, operand 0, single buffered']
    #allocation5 [shape = 's32[1]{0}', space=sflag, size = 0x4, scoped, tag = 'scoped memory for model_forward.1']
    #allocation6 [shape = 's32[1]{0}', space=sflag, size = 0x4, scoped, tag = 'scoped memory for model_forward.1']
    #allocation7 [shape = 'u8[131072]{0}', space=vmem, size = 0x20000, scoped, tag = 'input window, operand 4, single buffered']
    #allocation8 [shape = 's32[1]{0}', space=sflag, size = 0x4, scoped, tag = 'scoped memory for model_forward.1']
    #allocation9 [shape = 'u8[32768]{0}', space=vmem, size = 0x8000, scoped, tag = 'input window, operand 6, single buffered']
    #allocation10 [shape = 'u8[1024]{0}', space=vmem, size = 0x400, scoped, tag = 'output window, operand 0, single buffered']
    #allocation11 [shape = 'u8[1024]{0}', space=vmem, size = 0x400, scoped, tag = 'output window, operand 1, single buffered']
    #allocation12 [shape = 's32[1]{0}', space=sflag, size = 0x4, scoped, tag = 'scoped memory for model_forward.1']
    %21 = vsyncpa [#allocation5], 0
    %22 = vsyncpa [#allocation8], 0
    %23 = vsyncpa [#allocation6], 0
    %24 = vsyncpa [#allocation12], 0
    // Predicated region
    $region2: #{model_forward.1} parent=1 // pred_check
      _
    $region3: #{model_forward.1} parent=1 // pred_check_branch
      %26 = sbr.rel (0) target = $region5
    $region4: #{model_forward.1} parent=1 // pred_region
      %s28 = ssub.s32 4096, 4096
      %29 = vsyncadd [#allocation5], %s28
      %s30 = sshll.u32 [#allocation4], 4
      %s31 = int_to_ptr.vmem [resolvable:$true] %s30
      %36 = dma.hbm_to_vmem [thread:$0]  %s0, 4096, %s31, [#allocation5], 128, 128, 8
    $region5: #{model_forward.1} parent=1 // pred_fallthru
      _
    // Predicated region
    $region6: #{model_forward.1} parent=1 // pred_check
      _
    $region7: #{model_forward.1} parent=1 // pred_check_branch
      %38 = sbr.rel (0) target = $region9
    $region8: #{model_forward.1} parent=1 // pred_region
      _
    $region9: #{model_forward.1} parent=1 // pred_fallthru
      _
    // Predicated region
    $region10: #{model_forward.1} parent=1 // pred_check
      _
    $region11: #{model_forward.1} parent=1 // pred_check_branch
      %40 = sbr.rel (0) target = $region13
    $region12: #{model_forward.1} parent=1 // pred_region
      _
    $region13: #{model_forward.1} parent=1 // pred_fallthru
      _
    // Predicated region
    $region14: #{model_forward.1} parent=1 // pred_check
      _
    $region15: #{model_forward.1} parent=1 // pred_check_branch
      %42 = sbr.rel (0) target = $region17
    $region16: #{model_forward.1} parent=1 // pred_region
      _
    $region17: #{model_forward.1} parent=1 // pred_fallthru
      _
    // Predicated region
    $region18: #{model_forward.1} parent=1 // pred_check
      _
    $region19: #{model_forward.1} parent=1 // pred_check_branch
      %44 = sbr.rel (0) target = $region21
    $region20: #{model_forward.1} parent=1 // pred_region
      %s46 = ssub.s32 4096, 4096
      %47 = vsyncadd [#allocation8], %s46
      %s48 = sshll.u32 [#allocation7], 4
      %s49 = int_to_ptr.vmem [resolvable:$true] %s48
      %54 = dma.hbm_to_vmem [thread:$0]  %s4, 4096, %s49, [#allocation8], 256, 256, 16
    $region21: #{model_forward.1} parent=1 // pred_fallthru
      _
    // Predicated region
    $region22: #{model_forward.1} parent=1 // pred_check
      _
    $region23: #{model_forward.1} parent=1 // pred_check_branch
      %56 = sbr.rel (0) target = $region25
    $region24: #{model_forward.1} parent=1 // pred_region
      _
    $region25: #{model_forward.1} parent=1 // pred_fallthru
      _
    // Predicated region
    $region26: #{model_forward.1} parent=1 // pred_check
      _
    $region27: #{model_forward.1} parent=1 // pred_check_branch
      %58 = sbr.rel (0) target = $region29
    $region28: #{model_forward.1} parent=1 // pred_region
      %s60 = ssub.s32 1024, 1024
      %61 = vsyncadd [#allocation8], %s60
      %s62 = sshll.u32 [#allocation9], 4
      %s63 = int_to_ptr.vmem [resolvable:$true] %s62
      %68 = dma.hbm_to_vmem [thread:$0]  %s6, 1024, %s63, [#allocation8], 64, 64, 4
    $region29: #{model_forward.1} parent=1 // pred_fallthru
      _
    // Predicated region
    $region30: #{model_forward.1} parent=1 // pred_check
      _
    $region31: #{model_forward.1} parent=1 // pred_check_branch
      %70 = sbr.rel (0) target = $region33
    $region32: #{model_forward.1} parent=1 // pred_region
      _
    $region33: #{model_forward.1} parent=1 // pred_fallthru
      _
    // Predicated region
    $region34: #{model_forward.1} parent=1 // pred_check
      _
    $region35: #{model_forward.1} parent=1 // pred_check_branch
      %72 = sbr.rel (0) target = $region37
    $region36: #{model_forward.1} parent=1 // pred_region
      _
    $region37: #{model_forward.1} parent=1 // pred_fallthru
      _
    // Predicated region
    $region38: #{model_forward.1} parent=1 // pred_check
      _
    $region39: #{model_forward.1} parent=1 // pred_check_branch
      %74 = sbr.rel (0) target = $region41
    $region40: #{model_forward.1} parent=1 // pred_region
      _
    $region41: #{model_forward.1} parent=1 // pred_fallthru
      _
    // Predicated region
    $region42: #{model_forward.1} parent=1 // pred_check
      _
    $region43: #{model_forward.1} parent=1 // pred_check_branch
      %76 = sbr.rel (0) target = $region45
    $region44: #{model_forward.1} parent=1 // pred_region
      _
    $region45: #{model_forward.1} parent=1 // pred_fallthru
      _
    // Predicated region
    $region46: #{model_forward.1} parent=1 // pred_check
      _
    $region47: #{model_forward.1} parent=1 // pred_check_branch
      %78 = sbr.rel (0) target = $region49
    $region48: #{model_forward.1} parent=1 // pred_region
      _
    $region49: #{model_forward.1} parent=1 // pred_fallthru
      _
    // Predicated region
    $region50: #{model_forward.1} parent=1 // pred_check
      _
    $region51: #{model_forward.1} parent=1 // pred_check_branch
      %80 = sbr.rel (0) target = $region53
    $region52: #{model_forward.1} parent=1 // pred_region
      %81 = dma.done [#allocation5], 4096
    $region53: #{model_forward.1} parent=1 // pred_fallthru
      _
    // Predicated region
    $region54: #{model_forward.1} parent=1 // pred_check
      _
    $region55: #{model_forward.1} parent=1 // pred_check_branch
      %83 = sbr.rel (0) target = $region57
    $region56: #{model_forward.1} parent=1 // pred_region
      %84 = dma.done [#allocation8], 4096
    $region57: #{model_forward.1} parent=1 // pred_fallthru
      _
    // Predicated region
    $region58: #{model_forward.1} parent=1 // pred_check
      _
    $region59: #{model_forward.1} parent=1 // pred_check_branch
      %86 = sbr.rel (0) target = $region61
    $region60: #{model_forward.1} parent=1 // pred_region
      %87 = dma.done [#allocation8], 1024
    $region61: #{model_forward.1} parent=1 // pred_fallthru
      _
    %v89 = vld [vmem:[#allocation4] sm:$0xff]
    %v90 = vld [vmem:[#allocation4 + $0x8] sm:$0xff]
    %v91 = vld [vmem:[#allocation4 + $0x10] sm:$0xff]
    %v92 = vld [vmem:[#allocation4 + $0x18] sm:$0xff]
    %v93 = vld [vmem:[#allocation4 + $0x20] sm:$0xff]
    %v94 = vld [vmem:[#allocation4 + $0x28] sm:$0xff]
    %v95 = vld [vmem:[#allocation4 + $0x30] sm:$0xff]
    %v96 = vld [vmem:[#allocation4 + $0x38] sm:$0xff]
    %v97 = vld [vmem:[#allocation4 + $0x40] sm:$0xff]
    %v98 = vld [vmem:[#allocation4 + $0x48] sm:$0xff]
    %v99 = vld [vmem:[#allocation4 + $0x50] sm:$0xff]
    %v100 = vld [vmem:[#allocation4 + $0x58] sm:$0xff]
    %v101 = vld [vmem:[#allocation4 + $0x60] sm:$0xff]
    %v102 = vld [vmem:[#allocation4 + $0x68] sm:$0xff]
    %v103 = vld [vmem:[#allocation4 + $0x70] sm:$0xff]
    %v104 = vld [vmem:[#allocation4 + $0x78] sm:$0xff]
    %v105 = vld [vmem:[#allocation4 + $0x80] sm:$0xff]
    %v106 = vld [vmem:[#allocation4 + $0x88] sm:$0xff]
    %v107 = vld [vmem:[#allocation4 + $0x90] sm:$0xff]
    %v108 = vld [vmem:[#allocation4 + $0x98] sm:$0xff]
    %v109 = vld [vmem:[#allocation4 + $0xa0] sm:$0xff]
    %v110 = vld [vmem:[#allocation4 + $0xa8] sm:$0xff]
    %v111 = vld [vmem:[#allocation4 + $0xb0] sm:$0xff]
    %v112 = vld [vmem:[#allocation4 + $0xb8] sm:$0xff]
    %v113 = vld [vmem:[#allocation4 + $0xc0] sm:$0xff]
    %v114 = vld [vmem:[#allocation4 + $0xc8] sm:$0xff]
    %v115 = vld [vmem:[#allocation4 + $0xd0] sm:$0xff]
    %v116 = vld [vmem:[#allocation4 + $0xd8] sm:$0xff]
    %v117 = vld [vmem:[#allocation4 + $0xe0] sm:$0xff]
    %v118 = vld [vmem:[#allocation4 + $0xe8] sm:$0xff]
    %v119 = vld [vmem:[#allocation4 + $0xf0] sm:$0xff]
    %v120 = vld [vmem:[#allocation4 + $0xf8] sm:$0xff]
    %v121 = vld [vmem:[%s1] sm:$0x1]
    %v123 = vlaneseq
    %v124 = vshrl.u32 %v123, 7
    %v125 = vsub.s32 0, %v124
    %v126 = vrot.slane %v121, %v125
    %v128 = vmul.f32 %v89, %v126
    %v129 = vmul.f32 %v90, %v126
    %v130 = vmul.f32 %v91, %v126
    %v131 = vmul.f32 %v92, %v126
    %v132 = vmul.f32 %v93, %v126
    %v133 = vmul.f32 %v94, %v126
    %v134 = vmul.f32 %v95, %v126
    %v135 = vmul.f32 %v96, %v126
    %v136 = vmul.f32 %v97, %v126
    %v137 = vmul.f32 %v98, %v126
    %v138 = vmul.f32 %v99, %v126
    %v139 = vmul.f32 %v100, %v126
    %v140 = vmul.f32 %v101, %v126
    %v141 = vmul.f32 %v102, %v126
    %v142 = vmul.f32 %v103, %v126
    %v143 = vmul.f32 %v104, %v126
    %v144 = vmul.f32 %v105, %v126
    %v145 = vmul.f32 %v106, %v126
    %v146 = vmul.f32 %v107, %v126
    %v147 = vmul.f32 %v108, %v126
    %v148 = vmul.f32 %v109, %v126
    %v149 = vmul.f32 %v110, %v126
    %v150 = vmul.f32 %v111, %v126
    %v151 = vmul.f32 %v112, %v126
    %v152 = vmul.f32 %v113, %v126
    %v153 = vmul.f32 %v114, %v126
    %v154 = vmul.f32 %v115, %v126
    %v155 = vmul.f32 %v116, %v126
    %v156 = vmul.f32 %v117, %v126
    %v157 = vmul.f32 %v118, %v126
    %v158 = vmul.f32 %v119, %v126
    %v159 = vmul.f32 %v120, %v126
    %vm160 = vcmask 130048
    %v161 = vsel %vm160, %v128, 0.0
    %162 = vadd.xlane.f32.xlu0 %v161
    %v163 = vpop.xlane.xlu0 %162
    %v164 = vsel %vm160, %v129, 0.0
    %165 = vadd.xlane.f32.xlu0 %v164
    %v166 = vpop.xlane.xlu0 %165
    %v167 = vsel %vm160, %v130, 0.0
    %168 = vadd.xlane.f32.xlu0 %v167
    %v169 = vpop.xlane.xlu0 %168
    %v170 = vsel %vm160, %v131, 0.0
    %171 = vadd.xlane.f32.xlu0 %v170
    %v172 = vpop.xlane.xlu0 %171
    %v173 = vsel %vm160, %v132, 0.0
    %174 = vadd.xlane.f32.xlu0 %v173
    %v175 = vpop.xlane.xlu0 %174
    %v176 = vsel %vm160, %v133, 0.0
    %177 = vadd.xlane.f32.xlu0 %v176
    %v178 = vpop.xlane.xlu0 %177
    %v179 = vsel %vm160, %v134, 0.0
    %180 = vadd.xlane.f32.xlu0 %v179
    %v181 = vpop.xlane.xlu0 %180
    %v182 = vsel %vm160, %v135, 0.0
    %183 = vadd.xlane.f32.xlu0 %v182
    %v184 = vpop.xlane.xlu0 %183
    %v185 = vsel %vm160, %v136, 0.0
    %186 = vadd.xlane.f32.xlu0 %v185
    %v187 = vpop.xlane.xlu0 %186
    %v188 = vsel %vm160, %v137, 0.0
    %189 = vadd.xlane.f32.xlu0 %v188
    %v190 = vpop.xlane.xlu0 %189
    %v191 = vsel %vm160, %v138, 0.0
    %192 = vadd.xlane.f32.xlu0 %v191
    %v193 = vpop.xlane.xlu0 %192
    %v194 = vsel %vm160, %v139, 0.0
    %195 = vadd.xlane.f32.xlu0 %v194
    %v196 = vpop.xlane.xlu0 %195
    %v197 = vsel %vm160, %v140, 0.0
    %198 = vadd.xlane.f32.xlu0 %v197
    %v199 = vpop.xlane.xlu0 %198
    %v200 = vsel %vm160, %v141, 0.0
    %201 = vadd.xlane.f32.xlu0 %v200
    %v202 = vpop.xlane.xlu0 %201
    %v203 = vsel %vm160, %v142, 0.0
    %204 = vadd.xlane.f32.xlu0 %v203
    %v205 = vpop.xlane.xlu0 %204
    %v206 = vsel %vm160, %v143, 0.0
    %207 = vadd.xlane.f32.xlu0 %v206
    %v208 = vpop.xlane.xlu0 %207
    %v209 = vsel %vm160, %v144, 0.0
    %210 = vadd.xlane.f32.xlu0 %v209
    %v211 = vpop.xlane.xlu0 %210
    %v212 = vsel %vm160, %v145, 0.0
    %213 = vadd.xlane.f32.xlu0 %v212
    %v214 = vpop.xlane.xlu0 %213
    %v215 = vsel %vm160, %v146, 0.0
    %216 = vadd.xlane.f32.xlu0 %v215
    %v217 = vpop.xlane.xlu0 %216
    %v218 = vsel %vm160, %v147, 0.0
    %219 = vadd.xlane.f32.xlu0 %v218
    %v220 = vpop.xlane.xlu0 %219
    %v221 = vsel %vm160, %v148, 0.0
    %222 = vadd.xlane.f32.xlu0 %v221
    %v223 = vpop.xlane.xlu0 %222
    %v224 = vsel %vm160, %v149, 0.0
    %225 = vadd.xlane.f32.xlu0 %v224
    %v226 = vpop.xlane.xlu0 %225
    %v227 = vsel %vm160, %v150, 0.0
    %228 = vadd.xlane.f32.xlu0 %v227
    %v229 = vpop.xlane.xlu0 %228
    %v230 = vsel %vm160, %v151, 0.0
    %231 = vadd.xlane.f32.xlu0 %v230
    %v232 = vpop.xlane.xlu0 %231
    %v233 = vsel %vm160, %v152, 0.0
    %234 = vadd.xlane.f32.xlu0 %v233
    %v235 = vpop.xlane.xlu0 %234
    %v236 = vsel %vm160, %v153, 0.0
    %237 = vadd.xlane.f32.xlu0 %v236
    %v238 = vpop.xlane.xlu0 %237
    %v239 = vsel %vm160, %v154, 0.0
    %240 = vadd.xlane.f32.xlu0 %v239
    %v241 = vpop.xlane.xlu0 %240
    %v242 = vsel %vm160, %v155, 0.0
    %243 = vadd.xlane.f32.xlu0 %v242
    %v244 = vpop.xlane.xlu0 %243
    %v245 = vsel %vm160, %v156, 0.0
    %246 = vadd.xlane.f32.xlu0 %v245
    %v247 = vpop.xlane.xlu0 %246
    %v248 = vsel %vm160, %v157, 0.0
    %249 = vadd.xlane.f32.xlu0 %v248
    %v250 = vpop.xlane.xlu0 %249
    %v251 = vsel %vm160, %v158, 0.0
    %252 = vadd.xlane.f32.xlu0 %v251
    %v253 = vpop.xlane.xlu0 %252
    %v254 = vsel %vm160, %v159, 0.0
    %255 = vadd.xlane.f32.xlu0 %v254
    %v256 = vpop.xlane.xlu0 %255
    %s257 = sld [smem:[#allocation2]]
    %v258 = vstv %s257
    %v259 = vadd.f32 %v163, %v258
    %v260 = vadd.f32 %v166, %v258
    %v261 = vadd.f32 %v169, %v258
    %v262 = vadd.f32 %v172, %v258
    %v263 = vadd.f32 %v175, %v258
    %v264 = vadd.f32 %v178, %v258
    %v265 = vadd.f32 %v181, %v258
    %v266 = vadd.f32 %v184, %v258
    %v267 = vadd.f32 %v187, %v258
    %v268 = vadd.f32 %v190, %v258
    %v269 = vadd.f32 %v193, %v258
    %v270 = vadd.f32 %v196, %v258
    %v271 = vadd.f32 %v199, %v258
    %v272 = vadd.f32 %v202, %v258
    %v273 = vadd.f32 %v205, %v258
    %v274 = vadd.f32 %v208, %v258
    %v275 = vadd.f32 %v211, %v258
    %v276 = vadd.f32 %v214, %v258
    %v277 = vadd.f32 %v217, %v258
    %v278 = vadd.f32 %v220, %v258
    %v279 = vadd.f32 %v223, %v258
    %v280 = vadd.f32 %v226, %v258
    %v281 = vadd.f32 %v229, %v258
    %v282 = vadd.f32 %v232, %v258
    %v283 = vadd.f32 %v235, %v258
    %v284 = vadd.f32 %v238, %v258
    %v285 = vadd.f32 %v241, %v258
    %v286 = vadd.f32 %v244, %v258
    %v287 = vadd.f32 %v247, %v258
    %v288 = vadd.f32 %v250, %v258
    %v289 = vadd.f32 %v253, %v258
    %v290 = vadd.f32 %v256, %v258
    %v291 = vmax.f32 %v259, 0.0
    %v292 = vmax.f32 %v260, 0.0
    %v293 = vmax.f32 %v261, 0.0
    %v294 = vmax.f32 %v262, 0.0
    %v295 = vmax.f32 %v263, 0.0
    %v296 = vmax.f32 %v264, 0.0
    %v297 = vmax.f32 %v265, 0.0
    %v298 = vmax.f32 %v266, 0.0
    %v299 = vmax.f32 %v267, 0.0
    %v300 = vmax.f32 %v268, 0.0
    %v301 = vmax.f32 %v269, 0.0
    %v302 = vmax.f32 %v270, 0.0
    %v303 = vmax.f32 %v271, 0.0
    %v304 = vmax.f32 %v272, 0.0
    %v305 = vmax.f32 %v273, 0.0
    %v306 = vmax.f32 %v274, 0.0
    %v307 = vmax.f32 %v275, 0.0
    %v308 = vmax.f32 %v276, 0.0
    %v309 = vmax.f32 %v277, 0.0
    %v310 = vmax.f32 %v278, 0.0
    %v311 = vmax.f32 %v279, 0.0
    %v312 = vmax.f32 %v280, 0.0
    %v313 = vmax.f32 %v281, 0.0
    %v314 = vmax.f32 %v282, 0.0
    %v315 = vmax.f32 %v283, 0.0
    %v316 = vmax.f32 %v284, 0.0
    %v317 = vmax.f32 %v285, 0.0
    %v318 = vmax.f32 %v286, 0.0
    %v319 = vmax.f32 %v287, 0.0
    %v320 = vmax.f32 %v288, 0.0
    %v321 = vmax.f32 %v289, 0.0
    %v322 = vmax.f32 %v290, 0.0
    %v323 = vpack.c.bf16 %v292, %v291
    %v324 = vpack.c.bf16 %v294, %v293
    %v325 = vpack.c.bf16 %v296, %v295
    %v326 = vpack.c.bf16 %v298, %v297
    %v327 = vpack.c.bf16 %v300, %v299
    %v328 = vpack.c.bf16 %v302, %v301
    %v329 = vpack.c.bf16 %v304, %v303
    %v330 = vpack.c.bf16 %v306, %v305
    %v331 = vpack.c.bf16 %v308, %v307
    %v332 = vpack.c.bf16 %v310, %v309
    %v333 = vpack.c.bf16 %v312, %v311
    %v334 = vpack.c.bf16 %v314, %v313
    %v335 = vpack.c.bf16 %v316, %v315
    %v336 = vpack.c.bf16 %v318, %v317
    %v337 = vpack.c.bf16 %v320, %v319
    %v338 = vpack.c.bf16 %v322, %v321
    %v339 = vld [vmem:[%s3] sm:$0xff]
    %v340 = vld [vmem:[%s3 + $0x8] sm:$0xff]
    %v341 = vld [vmem:[%s3 + $0x10] sm:$0xff]
    %v342 = vld [vmem:[%s3 + $0x18] sm:$0xff]
    %v343 = vld [vmem:[%s5] sm:$0xf]
    %v345 = vlaneseq
    %v346 = vshrl.u32 %v345, 7
    %v347 = vsub.s32 0, %v346
    %v348 = vrot.slane %v343, %v347
    %v349 = vlaneseq
    %v350 = vshrl.u32 %v349, 7
    %v351 = vsub.s32 1, %v350
    %v352 = vrot.slane %v343, %v351
    %v353 = vlaneseq
    %v354 = vshrl.u32 %v353, 7
    %v355 = vsub.s32 2, %v354
    %v356 = vrot.slane %v343, %v355
    %v357 = vlaneseq
    %v358 = vshrl.u32 %v357, 7
    %v359 = vsub.s32 3, %v358
    %v360 = vrot.slane %v343, %v359
    %v381 = vunpack.c.l.b16 %v323
    %v382 = vunpack.c.h.b16 %v323
    %v383 = vunpack.c.l.b16 %v324
    %v384 = vunpack.c.h.b16 %v324
    %v385 = vunpack.c.l.b16 %v325
    %v386 = vunpack.c.h.b16 %v325
    %v387 = vunpack.c.l.b16 %v326
    %v388 = vunpack.c.h.b16 %v326
    %v389 = vunpack.c.l.b16 %v327
    %v390 = vunpack.c.h.b16 %v327
    %v391 = vunpack.c.l.b16 %v328
    %v392 = vunpack.c.h.b16 %v328
    %v393 = vunpack.c.l.b16 %v329
    %v394 = vunpack.c.h.b16 %v329
    %v395 = vunpack.c.l.b16 %v330
    %v396 = vunpack.c.h.b16 %v330
    %v397 = vunpack.c.l.b16 %v331
    %v398 = vunpack.c.h.b16 %v331
    %v399 = vunpack.c.l.b16 %v332
    %v400 = vunpack.c.h.b16 %v332
    %v401 = vunpack.c.l.b16 %v333
    %v402 = vunpack.c.h.b16 %v333
    %v403 = vunpack.c.l.b16 %v334
    %v404 = vunpack.c.h.b16 %v334
    %v405 = vunpack.c.l.b16 %v335
    %v406 = vunpack.c.h.b16 %v335
    %v407 = vunpack.c.l.b16 %v336
    %v408 = vunpack.c.h.b16 %v336
    %v409 = vunpack.c.l.b16 %v337
    %v410 = vunpack.c.h.b16 %v337
    %v411 = vunpack.c.l.b16 %v338
    %v412 = vunpack.c.h.b16 %v338
    %v413 = vlaneseq
    %v414 = vand.u32 %v413, 127
    %v415 = vlaneseq
    %v416 = vshrl.u32 %v415, 7
    %v417 = vsub.s32 %v414, %v416
    %v418 = vrot.slane %v381, %v417
    %v419 = vadd.s32 %v414, 4294967288
    %v420 = vlaneseq
    %v421 = vshrl.u32 %v420, 7
    %v422 = vsub.s32 %v419, %v421
    %v423 = vrot.slane %v382, %v422
    %vm424 = vcmask 130112
    %v425 = vsel %vm424, %v423, %v418
    %v426 = vlaneseq
    %v427 = vshrl.u32 %v426, 7
    %v428 = vsub.s32 %v414, %v427
    %v429 = vrot.slane %v383, %v428
    %v430 = vlaneseq
    %v431 = vshrl.u32 %v430, 7
    %v432 = vsub.s32 %v419, %v431
    %v433 = vrot.slane %v384, %v432
    %v434 = vsel %vm424, %v433, %v429
    %v435 = vlaneseq
    %v436 = vshrl.u32 %v435, 7
    %v437 = vsub.s32 %v414, %v436
    %v438 = vrot.slane %v385, %v437
    %v439 = vlaneseq
    %v440 = vshrl.u32 %v439, 7
    %v441 = vsub.s32 %v419, %v440
    %v442 = vrot.slane %v386, %v441
    %v443 = vsel %vm424, %v442, %v438
    %v444 = vlaneseq
    %v445 = vshrl.u32 %v444, 7
    %v446 = vsub.s32 %v414, %v445
    %v447 = vrot.slane %v387, %v446
    %v448 = vlaneseq
    %v449 = vshrl.u32 %v448, 7
    %v450 = vsub.s32 %v419, %v449
    %v451 = vrot.slane %v388, %v450
    %v452 = vsel %vm424, %v451, %v447
    %v453 = vlaneseq
    %v454 = vshrl.u32 %v453, 7
    %v455 = vsub.s32 %v414, %v454
    %v456 = vrot.slane %v389, %v455
    %v457 = vlaneseq
    %v458 = vshrl.u32 %v457, 7
    %v459 = vsub.s32 %v419, %v458
    %v460 = vrot.slane %v390, %v459
    %v461 = vsel %vm424, %v460, %v456
    %v462 = vlaneseq
    %v463 = vshrl.u32 %v462, 7
    %v464 = vsub.s32 %v414, %v463
    %v465 = vrot.slane %v391, %v464
    %v466 = vlaneseq
    %v467 = vshrl.u32 %v466, 7
    %v468 = vsub.s32 %v419, %v467
    %v469 = vrot.slane %v392, %v468
    %v470 = vsel %vm424, %v469, %v465
    %v471 = vlaneseq
    %v472 = vshrl.u32 %v471, 7
    %v473 = vsub.s32 %v414, %v472
    %v474 = vrot.slane %v393, %v473
    %v475 = vlaneseq
    %v476 = vshrl.u32 %v475, 7
    %v477 = vsub.s32 %v419, %v476
    %v478 = vrot.slane %v394, %v477
    %v479 = vsel %vm424, %v478, %v474
    %v480 = vlaneseq
    %v481 = vshrl.u32 %v480, 7
    %v482 = vsub.s32 %v414, %v481
    %v483 = vrot.slane %v395, %v482
    %v484 = vlaneseq
    %v485 = vshrl.u32 %v484, 7
    %v486 = vsub.s32 %v419, %v485
    %v487 = vrot.slane %v396, %v486
    %v488 = vsel %vm424, %v487, %v483
    %v489 = vlaneseq
    %v490 = vshrl.u32 %v489, 7
    %v491 = vsub.s32 %v414, %v490
    %v492 = vrot.slane %v397, %v491
    %v493 = vlaneseq
    %v494 = vshrl.u32 %v493, 7
    %v495 = vsub.s32 %v419, %v494
    %v496 = vrot.slane %v398, %v495
    %v497 = vsel %vm424, %v496, %v492
    %v498 = vlaneseq
    %v499 = vshrl.u32 %v498, 7
    %v500 = vsub.s32 %v414, %v499
    %v501 = vrot.slane %v399, %v500
    %v502 = vlaneseq
    %v503 = vshrl.u32 %v502, 7
    %v504 = vsub.s32 %v419, %v503
    %v505 = vrot.slane %v400, %v504
    %v506 = vsel %vm424, %v505, %v501
    %v507 = vlaneseq
    %v508 = vshrl.u32 %v507, 7
    %v509 = vsub.s32 %v414, %v508
    %v510 = vrot.slane %v401, %v509
    %v511 = vlaneseq
    %v512 = vshrl.u32 %v511, 7
    %v513 = vsub.s32 %v419, %v512
    %v514 = vrot.slane %v402, %v513
    %v515 = vsel %vm424, %v514, %v510
    %v516 = vlaneseq
    %v517 = vshrl.u32 %v516, 7
    %v518 = vsub.s32 %v414, %v517
    %v519 = vrot.slane %v403, %v518
    %v520 = vlaneseq
    %v521 = vshrl.u32 %v520, 7
    %v522 = vsub.s32 %v419, %v521
    %v523 = vrot.slane %v404, %v522
    %v524 = vsel %vm424, %v523, %v519
    %v525 = vlaneseq
    %v526 = vshrl.u32 %v525, 7
    %v527 = vsub.s32 %v414, %v526
    %v528 = vrot.slane %v405, %v527
    %v529 = vlaneseq
    %v530 = vshrl.u32 %v529, 7
    %v531 = vsub.s32 %v419, %v530
    %v532 = vrot.slane %v406, %v531
    %v533 = vsel %vm424, %v532, %v528
    %v534 = vlaneseq
    %v535 = vshrl.u32 %v534, 7
    %v536 = vsub.s32 %v414, %v535
    %v537 = vrot.slane %v407, %v536
    %v538 = vlaneseq
    %v539 = vshrl.u32 %v538, 7
    %v540 = vsub.s32 %v419, %v539
    %v541 = vrot.slane %v408, %v540
    %v542 = vsel %vm424, %v541, %v537
    %v543 = vlaneseq
    %v544 = vshrl.u32 %v543, 7
    %v545 = vsub.s32 %v414, %v544
    %v546 = vrot.slane %v409, %v545
    %v547 = vlaneseq
    %v548 = vshrl.u32 %v547, 7
    %v549 = vsub.s32 %v419, %v548
    %v550 = vrot.slane %v410, %v549
    %v551 = vsel %vm424, %v550, %v546
    %v552 = vlaneseq
    %v553 = vshrl.u32 %v552, 7
    %v554 = vsub.s32 %v414, %v553
    %v555 = vrot.slane %v411, %v554
    %v556 = vlaneseq
    %v557 = vshrl.u32 %v556, 7
    %v558 = vsub.s32 %v419, %v557
    %v559 = vrot.slane %v412, %v558
    %v560 = vsel %vm424, %v559, %v555
    %vm561 = vcmask 1041409
    %v562 = vsel %vm561, %v434, %v425
    %vm563 = vcmask 1042434
    %v564 = vsel %vm563, %v443, %v562
    %vm565 = vcmask 1043459
    %v566 = vsel %vm565, %v452, %v564
    %vm567 = vcmask 1044484
    %v568 = vsel %vm567, %v461, %v566
    %vm569 = vcmask 1045509
    %v570 = vsel %vm569, %v470, %v568
    %vm571 = vcmask 1046534
    %v572 = vsel %vm571, %v479, %v570
    %vm573 = vcmask 1047559
    %v574 = vsel %vm573, %v488, %v572
    %v575 = vsel %vm561, %v506, %v497
    %v576 = vsel %vm563, %v515, %v575
    %v577 = vsel %vm565, %v524, %v576
    %v578 = vsel %vm567, %v533, %v577
    %v579 = vsel %vm569, %v542, %v578
    %v580 = vsel %vm571, %v551, %v579
    %v581 = vsel %vm573, %v560, %v580
    %v582 = vpack.c.b16 %v581, %v574
    %v587 = vunpack.c.l.b16 %v339
    %v588 = vunpack.c.h.b16 %v339
    %v589 = vunpack.c.l.b16 %v340
    %v590 = vunpack.c.h.b16 %v340
    %v591 = vunpack.c.l.b16 %v341
    %v592 = vunpack.c.h.b16 %v341
    %v593 = vunpack.c.l.b16 %v342
    %v594 = vunpack.c.h.b16 %v342
    %v595 = vpack.c.b16 %v591, %v587
    %v596 = vpack.c.b16 %v592, %v588
    %v597 = vpack.c.b16 %v593, %v589
    %v598 = vpack.c.b16 %v594, %v590
    %v604 = vsel %vm160, %v582, 0
    %606 = vmatprep.subr.bf16.mxu0 %v596
    %607 = vmatpush1.bf16.msra.mxu0 %v595
    %608 = vmatprep.subr.bf16.mxu0 0
    %609 = vmatpush1.bf16.msra.mxu0 0
    %610 = vmatprep.subr.bf16.mxu0 0
    %611 = vmatpush1.bf16.msra.mxu0 0
    %612 = vmatprep.subr.bf16.mxu0 0
    %613 = vmatpush1.bf16.msra.mxu0 0
    %614 = vmatprep.subr.bf16.mxu0 0
    %615 = vmatpush1.bf16.msra.mxu0 0
    %616 = vmatprep.subr.bf16.mxu0 0
    %617 = vmatpush1.bf16.msra.mxu0 0
    %618 = vmatprep.subr.bf16.mxu0 0
    %619 = vmatpush1.bf16.msra.mxu0 0
    %620 = vmatprep.subr.bf16.mxu0 0
    %621 = vmatpush1.bf16.msra.mxu0 0
    %622 = vmatprep.subr.bf16.mxu0 0
    %623 = vmatpush1.bf16.msra.mxu0 0
    %624 = vmatprep.subr.bf16.mxu0 0
    %625 = vmatpush1.bf16.msra.mxu0 0
    %626 = vmatprep.subr.bf16.mxu0 0
    %627 = vmatpush1.bf16.msra.mxu0 0
    %628 = vmatprep.subr.bf16.mxu0 0
    %629 = vmatpush1.bf16.msra.mxu0 0
    %630 = vmatprep.subr.bf16.mxu0 0
    %631 = vmatpush1.bf16.msra.mxu0 0
    %632 = vmatprep.subr.bf16.mxu0 0
    %633 = vmatpush1.bf16.msra.mxu0 0
    %634 = vmatprep.subr.bf16.mxu0 0
    %635 = vmatpush1.bf16.msra.mxu0 0
    %636 = vmatprep.subr.bf16.mxu0 0
    %637 = vmatpush1.bf16.msra.mxu0 0
    %638 = vmatprep.mubr.bf16.mxu0 0
    %639 = vmatmul.mubr.bf16.gmra.mrb[0].mxu0 %v604
    %v640 = vpop.f32.mrb[0].mxu0
    %v641 = vadd.f32 %v348, %v640
    %v642 = vpop.f32.mrb[0].mxu0
    %v643 = vadd.f32 %v352, %v642
    %v644 = vpop.f32.mrb[0].mxu0
    %v645 = vadd.f32 %v348, %v644
    %v646 = vpop.f32.mrb[0].mxu0
    %v647 = vadd.f32 %v352, %v646
    %648 = vdwg.mxu0
    %649 = vmatprep.subr.bf16.mxu0 %v598
    %650 = vmatpush1.bf16.msra.mxu0 %v597
    %651 = vmatprep.subr.bf16.mxu0 0
    %652 = vmatpush1.bf16.msra.mxu0 0
    %653 = vmatprep.subr.bf16.mxu0 0
    %654 = vmatpush1.bf16.msra.mxu0 0
    %655 = vmatprep.subr.bf16.mxu0 0
    %656 = vmatpush1.bf16.msra.mxu0 0
    %657 = vmatprep.subr.bf16.mxu0 0
    %658 = vmatpush1.bf16.msra.mxu0 0
    %659 = vmatprep.subr.bf16.mxu0 0
    %660 = vmatpush1.bf16.msra.mxu0 0
    %661 = vmatprep.subr.bf16.mxu0 0
    %662 = vmatpush1.bf16.msra.mxu0 0
    %663 = vmatprep.subr.bf16.mxu0 0
    %664 = vmatpush1.bf16.msra.mxu0 0
    %665 = vmatprep.subr.bf16.mxu0 0
    %666 = vmatpush1.bf16.msra.mxu0 0
    %667 = vmatprep.subr.bf16.mxu0 0
    %668 = vmatpush1.bf16.msra.mxu0 0
    %669 = vmatprep.subr.bf16.mxu0 0
    %670 = vmatpush1.bf16.msra.mxu0 0
    %671 = vmatprep.subr.bf16.mxu0 0
    %672 = vmatpush1.bf16.msra.mxu0 0
    %673 = vmatprep.subr.bf16.mxu0 0
    %674 = vmatpush1.bf16.msra.mxu0 0
    %675 = vmatprep.subr.bf16.mxu0 0
    %676 = vmatpush1.bf16.msra.mxu0 0
    %677 = vmatprep.subr.bf16.mxu0 0
    %678 = vmatpush1.bf16.msra.mxu0 0
    %679 = vmatprep.subr.bf16.mxu0 0
    %680 = vmatpush1.bf16.msra.mxu0 0
    %681 = vmatprep.mubr.bf16.mxu0 0
    %682 = vmatmul.mubr.bf16.gmra.mrb[0].mxu0 %v604
    %v683 = vpop.f32.mrb[0].mxu0
    %v684 = vadd.f32 %v356, %v683
    %v685 = vpop.f32.mrb[0].mxu0
    %v686 = vadd.f32 %v360, %v685
    %v687 = vpop.f32.mrb[0].mxu0
    %v688 = vadd.f32 %v356, %v687
    %v689 = vpop.f32.mrb[0].mxu0
    %v690 = vadd.f32 %v360, %v689
    %691 = vdwg.mxu0
    %v692 = vld [vmem:[#allocation7] sm:$0xff]
    %v693 = vld [vmem:[#allocation7 + $0x8] sm:$0xff]
    %v694 = vld [vmem:[#allocation7 + $0x10] sm:$0xff]
    %v695 = vld [vmem:[#allocation7 + $0x18] sm:$0xff]
    %v696 = vld [vmem:[#allocation7 + $0x20] sm:$0xff]
    %v697 = vld [vmem:[#allocation7 + $0x28] sm:$0xff]
    %v698 = vld [vmem:[#allocation7 + $0x30] sm:$0xff]
    %v699 = vld [vmem:[#allocation7 + $0x38] sm:$0xff]
    %v700 = vld [vmem:[#allocation7 + $0x40] sm:$0xff]
    %v701 = vld [vmem:[#allocation7 + $0x48] sm:$0xff]
    %v702 = vld [vmem:[#allocation7 + $0x50] sm:$0xff]
    %v703 = vld [vmem:[#allocation7 + $0x58] sm:$0xff]
    %v704 = vld [vmem:[#allocation7 + $0x60] sm:$0xff]
    %v705 = vld [vmem:[#allocation7 + $0x68] sm:$0xff]
    %v706 = vld [vmem:[#allocation7 + $0x70] sm:$0xff]
    %v707 = vld [vmem:[#allocation7 + $0x78] sm:$0xff]
    %v708 = vld [vmem:[#allocation7 + $0x80] sm:$0xff]
    %v709 = vld [vmem:[#allocation7 + $0x88] sm:$0xff]
    %v710 = vld [vmem:[#allocation7 + $0x90] sm:$0xff]
    %v711 = vld [vmem:[#allocation7 + $0x98] sm:$0xff]
    %v712 = vld [vmem:[#allocation7 + $0xa0] sm:$0xff]
    %v713 = vld [vmem:[#allocation7 + $0xa8] sm:$0xff]
    %v714 = vld [vmem:[#allocation7 + $0xb0] sm:$0xff]
    %v715 = vld [vmem:[#allocation7 + $0xb8] sm:$0xff]
    %v716 = vld [vmem:[#allocation7 + $0xc0] sm:$0xff]
    %v717 = vld [vmem:[#allocation7 + $0xc8] sm:$0xff]
    %v718 = vld [vmem:[#allocation7 + $0xd0] sm:$0xff]
    %v719 = vld [vmem:[#allocation7 + $0xd8] sm:$0xff]
    %v720 = vld [vmem:[#allocation7 + $0xe0] sm:$0xff]
    %v721 = vld [vmem:[#allocation7 + $0xe8] sm:$0xff]
    %v722 = vld [vmem:[#allocation7 + $0xf0] sm:$0xff]
    %v723 = vld [vmem:[#allocation7 + $0xf8] sm:$0xff]
    %v756 = vunpack.c.l.b16 %v692
    %v757 = vunpack.c.h.b16 %v692
    %v758 = vunpack.c.l.b16 %v693
    %v759 = vunpack.c.h.b16 %v693
    %v760 = vunpack.c.l.b16 %v694
    %v761 = vunpack.c.h.b16 %v694
    %v762 = vunpack.c.l.b16 %v695
    %v763 = vunpack.c.h.b16 %v695
    %v764 = vunpack.c.l.b16 %v696
    %v765 = vunpack.c.h.b16 %v696
    %v766 = vunpack.c.l.b16 %v697
    %v767 = vunpack.c.h.b16 %v697
    %v768 = vunpack.c.l.b16 %v698
    %v769 = vunpack.c.h.b16 %v698
    %v770 = vunpack.c.l.b16 %v699
    %v771 = vunpack.c.h.b16 %v699
    %v772 = vunpack.c.l.b16 %v700
    %v773 = vunpack.c.h.b16 %v700
    %v774 = vunpack.c.l.b16 %v701
    %v775 = vunpack.c.h.b16 %v701
    %v776 = vunpack.c.l.b16 %v702
    %v777 = vunpack.c.h.b16 %v702
    %v778 = vunpack.c.l.b16 %v703
    %v779 = vunpack.c.h.b16 %v703
    %v780 = vunpack.c.l.b16 %v704
    %v781 = vunpack.c.h.b16 %v704
    %v782 = vunpack.c.l.b16 %v705
    %v783 = vunpack.c.h.b16 %v705
    %v784 = vunpack.c.l.b16 %v706
    %v785 = vunpack.c.h.b16 %v706
    %v786 = vunpack.c.l.b16 %v707
    %v787 = vunpack.c.h.b16 %v707
    %v788 = vunpack.c.l.b16 %v708
    %v789 = vunpack.c.h.b16 %v708
    %v790 = vunpack.c.l.b16 %v709
    %v791 = vunpack.c.h.b16 %v709
    %v792 = vunpack.c.l.b16 %v710
    %v793 = vunpack.c.h.b16 %v710
    %v794 = vunpack.c.l.b16 %v711
    %v795 = vunpack.c.h.b16 %v711
    %v796 = vunpack.c.l.b16 %v712
    %v797 = vunpack.c.h.b16 %v712
    %v798 = vunpack.c.l.b16 %v713
    %v799 = vunpack.c.h.b16 %v713
    %v800 = vunpack.c.l.b16 %v714
    %v801 = vunpack.c.h.b16 %v714
    %v802 = vunpack.c.l.b16 %v715
    %v803 = vunpack.c.h.b16 %v715
    %v804 = vunpack.c.l.b16 %v716
    %v805 = vunpack.c.h.b16 %v716
    %v806 = vunpack.c.l.b16 %v717
    %v807 = vunpack.c.h.b16 %v717
    %v808 = vunpack.c.l.b16 %v718
    %v809 = vunpack.c.h.b16 %v718
    %v810 = vunpack.c.l.b16 %v719
    %v811 = vunpack.c.h.b16 %v719
    %v812 = vunpack.c.l.b16 %v720
    %v813 = vunpack.c.h.b16 %v720
    %v814 = vunpack.c.l.b16 %v721
    %v815 = vunpack.c.h.b16 %v721
    %v816 = vunpack.c.l.b16 %v722
    %v817 = vunpack.c.h.b16 %v722
    %v818 = vunpack.c.l.b16 %v723
    %v819 = vunpack.c.h.b16 %v723
    %v820 = vpack.c.b16 %v760, %v756
    %v821 = vpack.c.b16 %v761, %v757
    %v822 = vpack.c.b16 %v762, %v758
    %v823 = vpack.c.b16 %v763, %v759
    %v824 = vpack.c.b16 %v768, %v764
    %v825 = vpack.c.b16 %v769, %v765
    %v826 = vpack.c.b16 %v770, %v766
    %v827 = vpack.c.b16 %v771, %v767
    %v828 = vpack.c.b16 %v776, %v772
    %v829 = vpack.c.b16 %v777, %v773
    %v830 = vpack.c.b16 %v778, %v774
    %v831 = vpack.c.b16 %v779, %v775
    %v832 = vpack.c.b16 %v784, %v780
    %v833 = vpack.c.b16 %v785, %v781
    %v834 = vpack.c.b16 %v786, %v782
    %v835 = vpack.c.b16 %v787, %v783
    %v836 = vpack.c.b16 %v792, %v788
    %v837 = vpack.c.b16 %v793, %v789
    %v838 = vpack.c.b16 %v794, %v790
    %v839 = vpack.c.b16 %v795, %v791
    %v840 = vpack.c.b16 %v800, %v796
    %v841 = vpack.c.b16 %v801, %v797
    %v842 = vpack.c.b16 %v802, %v798
    %v843 = vpack.c.b16 %v803, %v799
    %v844 = vpack.c.b16 %v808, %v804
    %v845 = vpack.c.b16 %v809, %v805
    %v846 = vpack.c.b16 %v810, %v806
    %v847 = vpack.c.b16 %v811, %v807
    %v848 = vpack.c.b16 %v816, %v812
    %v849 = vpack.c.b16 %v817, %v813
    %v850 = vpack.c.b16 %v818, %v814
    %v851 = vpack.c.b16 %v819, %v815
    %884 = vmatprep.subr.bf16.mxu0 %v821
    %885 = vmatpush1.bf16.msra.mxu0 %v820
    %886 = vmatprep.subr.bf16.mxu0 %v825
    %887 = vmatpush1.bf16.msra.mxu0 %v824
    %888 = vmatprep.subr.bf16.mxu0 %v829
    %889 = vmatpush1.bf16.msra.mxu0 %v828
    %890 = vmatprep.subr.bf16.mxu0 %v833
    %891 = vmatpush1.bf16.msra.mxu0 %v832
    %892 = vmatprep.subr.bf16.mxu0 %v837
    %893 = vmatpush1.bf16.msra.mxu0 %v836
    %894 = vmatprep.subr.bf16.mxu0 %v841
    %895 = vmatpush1.bf16.msra.mxu0 %v840
    %896 = vmatprep.subr.bf16.mxu0 %v845
    %897 = vmatpush1.bf16.msra.mxu0 %v844
    %898 = vmatprep.subr.bf16.mxu0 %v849
    %899 = vmatpush1.bf16.msra.mxu0 %v848
    %900 = vmatprep.subr.bf16.mxu0 0
    %901 = vmatpush1.bf16.msra.mxu0 0
    %902 = vmatprep.subr.bf16.mxu0 0
    %903 = vmatpush1.bf16.msra.mxu0 0
    %904 = vmatprep.subr.bf16.mxu0 0
    %905 = vmatpush1.bf16.msra.mxu0 0
    %906 = vmatprep.subr.bf16.mxu0 0
    %907 = vmatpush1.bf16.msra.mxu0 0
    %908 = vmatprep.subr.bf16.mxu0 0
    %909 = vmatpush1.bf16.msra.mxu0 0
    %910 = vmatprep.subr.bf16.mxu0 0
    %911 = vmatpush1.bf16.msra.mxu0 0
    %912 = vmatprep.subr.bf16.mxu0 0
    %913 = vmatpush1.bf16.msra.mxu0 0
    %914 = vmatprep.subr.bf16.mxu0 0
    %915 = vmatpush1.bf16.msra.mxu0 0
    %916 = vmatprep.mubr.bf16.mxu0 0
    %917 = vmatmul.mubr.bf16.gmra.mrb[0].mxu0 0
    %v918 = vpop.f32.mrb[0].mxu0
    %v919 = vadd.f32 0.0, %v918
    %v920 = vpop.f32.mrb[0].mxu0
    %v921 = vadd.f32 0.0, %v920
    %v922 = vpop.f32.mrb[0].mxu0
    %v923 = vpop.f32.mrb[0].mxu0
    %924 = vdwg.mxu0
    %925 = vmatprep.subr.bf16.mxu0 %v823
    %926 = vmatpush1.bf16.msra.mxu0 %v822
    %927 = vmatprep.subr.bf16.mxu0 %v827
    %928 = vmatpush1.bf16.msra.mxu0 %v826
    %929 = vmatprep.subr.bf16.mxu0 %v831
    %930 = vmatpush1.bf16.msra.mxu0 %v830
    %931 = vmatprep.subr.bf16.mxu0 %v835
    %932 = vmatpush1.bf16.msra.mxu0 %v834
    %933 = vmatprep.subr.bf16.mxu0 %v839
    %934 = vmatpush1.bf16.msra.mxu0 %v838
    %935 = vmatprep.subr.bf16.mxu0 %v843
    %936 = vmatpush1.bf16.msra.mxu0 %v842
    %937 = vmatprep.subr.bf16.mxu0 %v847
    %938 = vmatpush1.bf16.msra.mxu0 %v846
    %939 = vmatprep.subr.bf16.mxu0 %v851
    %940 = vmatpush1.bf16.msra.mxu0 %v850
    %941 = vmatprep.subr.bf16.mxu0 0
    %942 = vmatpush1.bf16.msra.mxu0 0
    %943 = vmatprep.subr.bf16.mxu0 0
    %944 = vmatpush1.bf16.msra.mxu0 0
    %945 = vmatprep.subr.bf16.mxu0 0
    %946 = vmatpush1.bf16.msra.mxu0 0
    %947 = vmatprep.subr.bf16.mxu0 0
    %948 = vmatpush1.bf16.msra.mxu0 0
    %949 = vmatprep.subr.bf16.mxu0 0
    %950 = vmatpush1.bf16.msra.mxu0 0
    %951 = vmatprep.subr.bf16.mxu0 0
    %952 = vmatpush1.bf16.msra.mxu0 0
    %953 = vmatprep.subr.bf16.mxu0 0
    %954 = vmatpush1.bf16.msra.mxu0 0
    %955 = vmatprep.subr.bf16.mxu0 0
    %956 = vmatpush1.bf16.msra.mxu0 0
    %957 = vmatprep.mubr.bf16.mxu0 0
    %958 = vmatmul.mubr.bf16.gmra.mrb[0].mxu0 0
    %v959 = vpop.f32.mrb[0].mxu0
    %v960 = vadd.f32 0.0, %v959
    %v961 = vpop.f32.mrb[0].mxu0
    %v962 = vadd.f32 0.0, %v961
    %v963 = vpop.f32.mrb[0].mxu0
    %v964 = vpop.f32.mrb[0].mxu0
    %965 = vdwg.mxu0
    %v970 = vrot.slane %v919, 1
    %v971 = vrot.slane %v921, 1
    %v972 = vrot.slane %v960, 1
    %v973 = vrot.slane %v962, 1
    %v982 = vadd.f32 %v641, %v919
    %v983 = vadd.f32 %v643, %v921
    %v984 = vadd.f32 %v684, %v960
    %v985 = vadd.f32 %v686, %v962
    %v986 = vadd.f32 %v645, %v970
    %v987 = vadd.f32 %v647, %v971
    %v988 = vadd.f32 %v688, %v972
    %v989 = vadd.f32 %v690, %v973
    %v990 = vtanh.pop %v982
    %v991 = vtanh.pop %v983
    %v992 = vtanh.pop %v984
    %v993 = vtanh.pop %v985
    %v994 = vtanh.pop %v986
    %v995 = vtanh.pop %v987
    %v996 = vtanh.pop %v988
    %v997 = vtanh.pop %v989
    %v998 = vmul.f32 %v990, 0.5
    %v999 = vmul.f32 %v994, 0.5
    %v1000 = vadd.f32 %v998, 0.5
    %v1001 = vadd.f32 %v999, 0.5
    %v1002 = vmul.f32 %v991, 0.5
    %v1003 = vmul.f32 %v995, 0.5
    %v1004 = vadd.f32 %v1002, 0.5
    %v1005 = vadd.f32 %v1003, 0.5
    %v1006 = vmul.f32 %v993, 0.5
    %v1007 = vmul.f32 %v997, 0.5
    %v1008 = vadd.f32 %v1006, 0.5
    %v1009 = vadd.f32 %v1007, 0.5
    %v1010 = vmul.f32 %v1004, 0.0
    %v1011 = vmul.f32 %v1005, 0.0
    %v1012 = vmul.f32 %v1000, %v992
    %v1013 = vmul.f32 %v1001, %v996
    %v1014 = vadd.f32 %v1010, %v1012
    %v1015 = vadd.f32 %v1011, %v1013
    %v1016 = vtanh.pop %v1014
    %v1017 = vtanh.pop %v1015
    %v1018 = vmul.f32 %v1008, %v1016
    %v1019 = vmul.f32 %v1009, %v1017
    %v1020 = vpack.c.bf16 %v1018, %v1018
    %v1021 = vpack.c.bf16 %v1019, %v1019
    %v1024 = vunpack.c.l.b16 %v1020
    %v1025 = vunpack.c.l.b16 %v1021
    %v1026 = vrot.slane %v1025, 7
    %v1027 = vsel %vm561, %v1026, %v1024
    %v1028 = vpack.c.b16 %v1027, %v1027
    %1030 = vmatprep.subr.bf16.mxu0 %v821
    %1031 = vmatpush1.bf16.msra.mxu0 %v820
    %1032 = vmatprep.subr.bf16.mxu0 %v825
    %1033 = vmatpush1.bf16.msra.mxu0 %v824
    %1034 = vmatprep.subr.bf16.mxu0 %v829
    %1035 = vmatpush1.bf16.msra.mxu0 %v828
    %1036 = vmatprep.subr.bf16.mxu0 %v833
    %1037 = vmatpush1.bf16.msra.mxu0 %v832
    %1038 = vmatprep.subr.bf16.mxu0 %v837
    %1039 = vmatpush1.bf16.msra.mxu0 %v836
    %1040 = vmatprep.subr.bf16.mxu0 %v841
    %1041 = vmatpush1.bf16.msra.mxu0 %v840
    %1042 = vmatprep.subr.bf16.mxu0 %v845
    %1043 = vmatpush1.bf16.msra.mxu0 %v844
    %1044 = vmatprep.subr.bf16.mxu0 %v849
    %1045 = vmatpush1.bf16.msra.mxu0 %v848
    %1046 = vmatprep.subr.bf16.mxu0 0
    %1047 = vmatpush1.bf16.msra.mxu0 0
    %1048 = vmatprep.subr.bf16.mxu0 0
    %1049 = vmatpush1.bf16.msra.mxu0 0
    %1050 = vmatprep.subr.bf16.mxu0 0
    %1051 = vmatpush1.bf16.msra.mxu0 0
    %1052 = vmatprep.subr.bf16.mxu0 0
    %1053 = vmatpush1.bf16.msra.mxu0 0
    %1054 = vmatprep.subr.bf16.mxu0 0
    %1055 = vmatpush1.bf16.msra.mxu0 0
    %1056 = vmatprep.subr.bf16.mxu0 0
    %1057 = vmatpush1.bf16.msra.mxu0 0
    %1058 = vmatprep.subr.bf16.mxu0 0
    %1059 = vmatpush1.bf16.msra.mxu0 0
    %1060 = vmatprep.subr.bf16.mxu0 0
    %1061 = vmatpush1.bf16.msra.mxu0 0
    %1062 = vmatprep.mubr.bf16.mxu0 0
    %1063 = vmatmul.mubr.bf16.gmra.mrb[0].mxu0 %v1028
    %v1064 = vpop.f32.mrb[0].mxu0
    %v1065 = vadd.f32 0.0, %v1064
    %v1066 = vpop.f32.mrb[0].mxu0
    %v1067 = vadd.f32 0.0, %v1066
    %v1068 = vpop.f32.mrb[0].mxu0
    %v1069 = vpop.f32.mrb[0].mxu0
    %1070 = vdwg.mxu0
    %1071 = vmatprep.subr.bf16.mxu0 %v823
    %1072 = vmatpush1.bf16.msra.mxu0 %v822
    %1073 = vmatprep.subr.bf16.mxu0 %v827
    %1074 = vmatpush1.bf16.msra.mxu0 %v826
    %1075 = vmatprep.subr.bf16.mxu0 %v831
    %1076 = vmatpush1.bf16.msra.mxu0 %v830
    %1077 = vmatprep.subr.bf16.mxu0 %v835
    %1078 = vmatpush1.bf16.msra.mxu0 %v834
    %1079 = vmatprep.subr.bf16.mxu0 %v839
    %1080 = vmatpush1.bf16.msra.mxu0 %v838
    %1081 = vmatprep.subr.bf16.mxu0 %v843
    %1082 = vmatpush1.bf16.msra.mxu0 %v842
    %1083 = vmatprep.subr.bf16.mxu0 %v847
    %1084 = vmatpush1.bf16.msra.mxu0 %v846
    %1085 = vmatprep.subr.bf16.mxu0 %v851
    %1086 = vmatpush1.bf16.msra.mxu0 %v850
    %1087 = vmatprep.subr.bf16.mxu0 0
    %1088 = vmatpush1.bf16.msra.mxu0 0
    %1089 = vmatprep.subr.bf16.mxu0 0
    %1090 = vmatpush1.bf16.msra.mxu0 0
    %1091 = vmatprep.subr.bf16.mxu0 0
    %1092 = vmatpush1.bf16.msra.mxu0 0
    %1093 = vmatprep.subr.bf16.mxu0 0
    %1094 = vmatpush1.bf16.msra.mxu0 0
    %1095 = vmatprep.subr.bf16.mxu0 0
    %1096 = vmatpush1.bf16.msra.mxu0 0
    %1097 = vmatprep.subr.bf16.mxu0 0
    %1098 = vmatpush1.bf16.msra.mxu0 0
    %1099 = vmatprep.subr.bf16.mxu0 0
    %1100 = vmatpush1.bf16.msra.mxu0 0
    %1101 = vmatprep.subr.bf16.mxu0 0
    %1102 = vmatpush1.bf16.msra.mxu0 0
    %1103 = vmatprep.mubr.bf16.mxu0 0
    %1104 = vmatmul.mubr.bf16.gmra.mrb[0].mxu0 %v1028
    %v1105 = vpop.f32.mrb[0].mxu0
    %v1106 = vadd.f32 0.0, %v1105
    %v1107 = vpop.f32.mrb[0].mxu0
    %v1108 = vadd.f32 0.0, %v1107
    %v1109 = vpop.f32.mrb[0].mxu0
    %v1110 = vpop.f32.mrb[0].mxu0
    %1111 = vdwg.mxu0
    %v1116 = vrot.slane %v1065, 7
    %v1117 = vrot.slane %v1067, 7
    %v1118 = vrot.slane %v1106, 7
    %v1119 = vrot.slane %v1108, 7
    %v1128 = vadd.f32 %v641, %v1116
    %v1129 = vadd.f32 %v643, %v1117
    %v1130 = vadd.f32 %v684, %v1118
    %v1131 = vadd.f32 %v686, %v1119
    %v1132 = vadd.f32 %v645, %v1065
    %v1133 = vadd.f32 %v647, %v1067
    %v1134 = vadd.f32 %v688, %v1106
    %v1135 = vadd.f32 %v690, %v1108
    %v1136 = vtanh.pop %v1128
    %v1137 = vtanh.pop %v1129
    %v1138 = vtanh.pop %v1130
    %v1139 = vtanh.pop %v1131
    %v1140 = vtanh.pop %v1132
    %v1141 = vtanh.pop %v1133
    %v1142 = vtanh.pop %v1134
    %v1143 = vtanh.pop %v1135
    %v1144 = vmul.f32 %v1136, 0.5
    %v1145 = vmul.f32 %v1140, 0.5
    %v1146 = vadd.f32 %v1144, 0.5
    %v1147 = vadd.f32 %v1145, 0.5
    %v1148 = vmul.f32 %v1137, 0.5
    %v1149 = vmul.f32 %v1141, 0.5
    %v1150 = vadd.f32 %v1148, 0.5
    %v1151 = vadd.f32 %v1149, 0.5
    %v1152 = vmul.f32 %v1139, 0.5
    %v1153 = vmul.f32 %v1143, 0.5
    %v1154 = vadd.f32 %v1152, 0.5
    %v1155 = vadd.f32 %v1153, 0.5
    %v1158 = vrot.slane %v1014, 7
    %v1159 = vrot.slane %v1015, 7
    %v1162 = vmul.f32 %v1150, %v1158
    %v1163 = vmul.f32 %v1151, %v1159
    %v1164 = vmul.f32 %v1146, %v1138
    %v1165 = vmul.f32 %v1147, %v1142
    %v1166 = vadd.f32 %v1162, %v1164
    %v1167 = vadd.f32 %v1163, %v1165
    %v1168 = vtanh.pop %v1166
    %v1169 = vtanh.pop %v1167
    %v1170 = vmul.f32 %v1154, %v1168
    %v1171 = vmul.f32 %v1155, %v1169
    %v1172 = vpack.c.bf16 %v1170, %v1170
    %v1173 = vpack.c.bf16 %v1171, %v1171
    %v1176 = vunpack.c.l.b16 %v1172
    %v1177 = vunpack.c.l.b16 %v1173
    %v1178 = vrot.slane %v1176, 1
    %v1179 = vsel %vm561, %v1177, %v1178
    %v1180 = vpack.c.b16 %v1179, %v1179
    %1182 = vmatprep.subr.bf16.mxu0 %v821
    %1183 = vmatpush1.bf16.msra.mxu0 %v820
    %1184 = vmatprep.subr.bf16.mxu0 %v825
    %1185 = vmatpush1.bf16.msra.mxu0 %v824
    %1186 = vmatprep.subr.bf16.mxu0 %v829
    %1187 = vmatpush1.bf16.msra.mxu0 %v828
    %1188 = vmatprep.subr.bf16.mxu0 %v833
    %1189 = vmatpush1.bf16.msra.mxu0 %v832
    %1190 = vmatprep.subr.bf16.mxu0 %v837
    %1191 = vmatpush1.bf16.msra.mxu0 %v836
    %1192 = vmatprep.subr.bf16.mxu0 %v841
    %1193 = vmatpush1.bf16.msra.mxu0 %v840
    %1194 = vmatprep.subr.bf16.mxu0 %v845
    %1195 = vmatpush1.bf16.msra.mxu0 %v844
    %1196 = vmatprep.subr.bf16.mxu0 %v849
    %1197 = vmatpush1.bf16.msra.mxu0 %v848
    %1198 = vmatprep.subr.bf16.mxu0 0
    %1199 = vmatpush1.bf16.msra.mxu0 0
    %1200 = vmatprep.subr.bf16.mxu0 0
    %1201 = vmatpush1.bf16.msra.mxu0 0
    %1202 = vmatprep.subr.bf16.mxu0 0
    %1203 = vmatpush1.bf16.msra.mxu0 0
    %1204 = vmatprep.subr.bf16.mxu0 0
    %1205 = vmatpush1.bf16.msra.mxu0 0
    %1206 = vmatprep.subr.bf16.mxu0 0
    %1207 = vmatpush1.bf16.msra.mxu0 0
    %1208 = vmatprep.subr.bf16.mxu0 0
    %1209 = vmatpush1.bf16.msra.mxu0 0
    %1210 = vmatprep.subr.bf16.mxu0 0
    %1211 = vmatpush1.bf16.msra.mxu0 0
    %1212 = vmatprep.subr.bf16.mxu0 0
    %1213 = vmatpush1.bf16.msra.mxu0 0
    %1214 = vmatprep.mubr.bf16.mxu0 0
    %1215 = vmatmul.mubr.bf16.gmra.mrb[0].mxu0 %v1180
    %v1216 = vpop.f32.mrb[0].mxu0
    %v1217 = vadd.f32 0.0, %v1216
    %v1218 = vpop.f32.mrb[0].mxu0
    %v1219 = vadd.f32 0.0, %v1218
    %v1220 = vpop.f32.mrb[0].mxu0
    %v1221 = vpop.f32.mrb[0].mxu0
    %1222 = vdwg.mxu0
    %1223 = vmatprep.subr.bf16.mxu0 %v823
    %1224 = vmatpush1.bf16.msra.mxu0 %v822
    %1225 = vmatprep.subr.bf16.mxu0 %v827
    %1226 = vmatpush1.bf16.msra.mxu0 %v826
    %1227 = vmatprep.subr.bf16.mxu0 %v831
    %1228 = vmatpush1.bf16.msra.mxu0 %v830
    %1229 = vmatprep.subr.bf16.mxu0 %v835
    %1230 = vmatpush1.bf16.msra.mxu0 %v834
    %1231 = vmatprep.subr.bf16.mxu0 %v839
    %1232 = vmatpush1.bf16.msra.mxu0 %v838
    %1233 = vmatprep.subr.bf16.mxu0 %v843
    %1234 = vmatpush1.bf16.msra.mxu0 %v842
    %1235 = vmatprep.subr.bf16.mxu0 %v847
    %1236 = vmatpush1.bf16.msra.mxu0 %v846
    %1237 = vmatprep.subr.bf16.mxu0 %v851
    %1238 = vmatpush1.bf16.msra.mxu0 %v850
    %1239 = vmatprep.subr.bf16.mxu0 0
    %1240 = vmatpush1.bf16.msra.mxu0 0
    %1241 = vmatprep.subr.bf16.mxu0 0
    %1242 = vmatpush1.bf16.msra.mxu0 0
    %1243 = vmatprep.subr.bf16.mxu0 0
    %1244 = vmatpush1.bf16.msra.mxu0 0
    %1245 = vmatprep.subr.bf16.mxu0 0
    %1246 = vmatpush1.bf16.msra.mxu0 0
    %1247 = vmatprep.subr.bf16.mxu0 0
    %1248 = vmatpush1.bf16.msra.mxu0 0
    %1249 = vmatprep.subr.bf16.mxu0 0
    %1250 = vmatpush1.bf16.msra.mxu0 0
    %1251 = vmatprep.subr.bf16.mxu0 0
    %1252 = vmatpush1.bf16.msra.mxu0 0
    %1253 = vmatprep.subr.bf16.mxu0 0
    %1254 = vmatpush1.bf16.msra.mxu0 0
    %1255 = vmatprep.mubr.bf16.mxu0 0
    %1256 = vmatmul.mubr.bf16.gmra.mrb[0].mxu0 %v1180
    %v1257 = vpop.f32.mrb[0].mxu0
    %v1258 = vadd.f32 0.0, %v1257
    %v1259 = vpop.f32.mrb[0].mxu0
    %v1260 = vadd.f32 0.0, %v1259
    %v1261 = vpop.f32.mrb[0].mxu0
    %v1262 = vpop.f32.mrb[0].mxu0
    %1263 = vdwg.mxu0
    %v1268 = vrot.slane %v1217, 6
    %v1269 = vrot.slane %v1219, 6
    %v1270 = vrot.slane %v1258, 6
    %v1271 = vrot.slane %v1260, 6
    %v1272 = vrot.slane %v1217, 7
    %v1273 = vrot.slane %v1219, 7
    %v1274 = vrot.slane %v1258, 7
    %v1275 = vrot.slane %v1260, 7
    %v1284 = vadd.f32 %v641, %v1268
    %v1285 = vadd.f32 %v643, %v1269
    %v1286 = vadd.f32 %v684, %v1270
    %v1287 = vadd.f32 %v686, %v1271
    %v1288 = vadd.f32 %v645, %v1272
    %v1289 = vadd.f32 %v647, %v1273
    %v1290 = vadd.f32 %v688, %v1274
    %v1291 = vadd.f32 %v690, %v1275
    %v1292 = vtanh.pop %v1284
    %v1293 = vtanh.pop %v1285
    %v1294 = vtanh.pop %v1286
    %v1295 = vtanh.pop %v1287
    %v1296 = vtanh.pop %v1288
    %v1297 = vtanh.pop %v1289
    %v1298 = vtanh.pop %v1290
    %v1299 = vtanh.pop %v1291
    %v1300 = vmul.f32 %v1292, 0.5
    %v1301 = vmul.f32 %v1296, 0.5
    %v1302 = vadd.f32 %v1300, 0.5
    %v1303 = vadd.f32 %v1301, 0.5
    %v1304 = vmul.f32 %v1293, 0.5
    %v1305 = vmul.f32 %v1297, 0.5
    %v1306 = vadd.f32 %v1304, 0.5
    %v1307 = vadd.f32 %v1305, 0.5
    %v1308 = vmul.f32 %v1295, 0.5
    %v1309 = vmul.f32 %v1299, 0.5
    %v1310 = vadd.f32 %v1308, 0.5
    %v1311 = vadd.f32 %v1309, 0.5
    %v1314 = vrot.slane %v1166, 7
    %v1315 = vrot.slane %v1167, 7
    %v1318 = vmul.f32 %v1306, %v1314
    %v1319 = vmul.f32 %v1307, %v1315
    %v1320 = vmul.f32 %v1302, %v1294
    %v1321 = vmul.f32 %v1303, %v1298
    %v1322 = vadd.f32 %v1318, %v1320
    %v1323 = vadd.f32 %v1319, %v1321
    %v1324 = vtanh.pop %v1322
    %v1325 = vtanh.pop %v1323
    %v1326 = vmul.f32 %v1310, %v1324
    %v1327 = vmul.f32 %v1311, %v1325
    %v1328 = vpack.c.bf16 %v1326, %v1326
    %v1329 = vpack.c.bf16 %v1327, %v1327
    %v1332 = vunpack.c.l.b16 %v1328
    %v1333 = vunpack.c.l.b16 %v1329
    %v1334 = vrot.slane %v1332, 2
    %v1335 = vrot.slane %v1333, 1
    %v1336 = vsel %vm561, %v1335, %v1334
    %v1337 = vpack.c.b16 %v1336, %v1336
    %1339 = vmatprep.subr.bf16.mxu0 %v821
    %1340 = vmatpush1.bf16.msra.mxu0 %v820
    %1341 = vmatprep.subr.bf16.mxu0 %v825
    %1342 = vmatpush1.bf16.msra.mxu0 %v824
    %1343 = vmatprep.subr.bf16.mxu0 %v829
    %1344 = vmatpush1.bf16.msra.mxu0 %v828
    %1345 = vmatprep.subr.bf16.mxu0 %v833
    %1346 = vmatpush1.bf16.msra.mxu0 %v832
    %1347 = vmatprep.subr.bf16.mxu0 %v837
    %1348 = vmatpush1.bf16.msra.mxu0 %v836
    %1349 = vmatprep.subr.bf16.mxu0 %v841
    %1350 = vmatpush1.bf16.msra.mxu0 %v840
    %1351 = vmatprep.subr.bf16.mxu0 %v845
    %1352 = vmatpush1.bf16.msra.mxu0 %v844
    %1353 = vmatprep.subr.bf16.mxu0 %v849
    %1354 = vmatpush1.bf16.msra.mxu0 %v848
    %1355 = vmatprep.subr.bf16.mxu0 0
    %1356 = vmatpush1.bf16.msra.mxu0 0
    %1357 = vmatprep.subr.bf16.mxu0 0
    %1358 = vmatpush1.bf16.msra.mxu0 0
    %1359 = vmatprep.subr.bf16.mxu0 0
    %1360 = vmatpush1.bf16.msra.mxu0 0
    %1361 = vmatprep.subr.bf16.mxu0 0
    %1362 = vmatpush1.bf16.msra.mxu0 0
    %1363 = vmatprep.subr.bf16.mxu0 0
    %1364 = vmatpush1.bf16.msra.mxu0 0
    %1365 = vmatprep.subr.bf16.mxu0 0
    %1366 = vmatpush1.bf16.msra.mxu0 0
    %1367 = vmatprep.subr.bf16.mxu0 0
    %1368 = vmatpush1.bf16.msra.mxu0 0
    %1369 = vmatprep.subr.bf16.mxu0 0
    %1370 = vmatpush1.bf16.msra.mxu0 0
    %1371 = vmatprep.mubr.bf16.mxu0 0
    %1372 = vmatmul.mubr.bf16.gmra.mrb[0].mxu0 %v1337
    %v1373 = vpop.f32.mrb[0].mxu0
    %v1374 = vadd.f32 0.0, %v1373
    %v1375 = vpop.f32.mrb[0].mxu0
    %v1376 = vadd.f32 0.0, %v1375
    %v1377 = vpop.f32.mrb[0].mxu0
    %v1378 = vpop.f32.mrb[0].mxu0
    %1379 = vdwg.mxu0
    %1380 = vmatprep.subr.bf16.mxu0 %v823
    %1381 = vmatpush1.bf16.msra.mxu0 %v822
    %1382 = vmatprep.subr.bf16.mxu0 %v827
    %1383 = vmatpush1.bf16.msra.mxu0 %v826
    %1384 = vmatprep.subr.bf16.mxu0 %v831
    %1385 = vmatpush1.bf16.msra.mxu0 %v830
    %1386 = vmatprep.subr.bf16.mxu0 %v835
    %1387 = vmatpush1.bf16.msra.mxu0 %v834
    %1388 = vmatprep.subr.bf16.mxu0 %v839
    %1389 = vmatpush1.bf16.msra.mxu0 %v838
    %1390 = vmatprep.subr.bf16.mxu0 %v843
    %1391 = vmatpush1.bf16.msra.mxu0 %v842
    %1392 = vmatprep.subr.bf16.mxu0 %v847
    %1393 = vmatpush1.bf16.msra.mxu0 %v846
    %1394 = vmatprep.subr.bf16.mxu0 %v851
    %1395 = vmatpush1.bf16.msra.mxu0 %v850
    %1396 = vmatprep.subr.bf16.mxu0 0
    %1397 = vmatpush1.bf16.msra.mxu0 0
    %1398 = vmatprep.subr.bf16.mxu0 0
    %1399 = vmatpush1.bf16.msra.mxu0 0
    %1400 = vmatprep.subr.bf16.mxu0 0
    %1401 = vmatpush1.bf16.msra.mxu0 0
    %1402 = vmatprep.subr.bf16.mxu0 0
    %1403 = vmatpush1.bf16.msra.mxu0 0
    %1404 = vmatprep.subr.bf16.mxu0 0
    %1405 = vmatpush1.bf16.msra.mxu0 0
    %1406 = vmatprep.subr.bf16.mxu0 0
    %1407 = vmatpush1.bf16.msra.mxu0 0
    %1408 = vmatprep.subr.bf16.mxu0 0
    %1409 = vmatpush1.bf16.msra.mxu0 0
    %1410 = vmatprep.subr.bf16.mxu0 0
    %1411 = vmatpush1.bf16.msra.mxu0 0
    %1412 = vmatprep.mubr.bf16.mxu0 0
    %1413 = vmatmul.mubr.bf16.gmra.mrb[0].mxu0 %v1337
    %v1414 = vpop.f32.mrb[0].mxu0
    %v1415 = vadd.f32 0.0, %v1414
    %v1416 = vpop.f32.mrb[0].mxu0
    %v1417 = vadd.f32 0.0, %v1416
    %v1418 = vpop.f32.mrb[0].mxu0
    %v1419 = vpop.f32.mrb[0].mxu0
    %1420 = vdwg.mxu0
    %v1425 = vrot.slane %v1374, 5
    %v1426 = vrot.slane %v1376, 5
    %v1427 = vrot.slane %v1415, 5
    %v1428 = vrot.slane %v1417, 5
    %v1429 = vrot.slane %v1374, 6
    %v1430 = vrot.slane %v1376, 6
    %v1431 = vrot.slane %v1415, 6
    %v1432 = vrot.slane %v1417, 6
    %v1441 = vadd.f32 %v641, %v1425
    %v1442 = vadd.f32 %v643, %v1426
    %v1443 = vadd.f32 %v684, %v1427
    %v1444 = vadd.f32 %v686, %v1428
    %v1445 = vadd.f32 %v645, %v1429
    %v1446 = vadd.f32 %v647, %v1430
    %v1447 = vadd.f32 %v688, %v1431
    %v1448 = vadd.f32 %v690, %v1432
    %v1449 = vtanh.pop %v1441
    %v1450 = vtanh.pop %v1442
    %v1451 = vtanh.pop %v1443
    %v1452 = vtanh.pop %v1444
    %v1453 = vtanh.pop %v1445
    %v1454 = vtanh.pop %v1446
    %v1455 = vtanh.pop %v1447
    %v1456 = vtanh.pop %v1448
    %v1457 = vmul.f32 %v1449, 0.5
    %v1458 = vmul.f32 %v1453, 0.5
    %v1459 = vadd.f32 %v1457, 0.5
    %v1460 = vadd.f32 %v1458, 0.5
    %v1461 = vmul.f32 %v1450, 0.5
    %v1462 = vmul.f32 %v1454, 0.5
    %v1463 = vadd.f32 %v1461, 0.5
    %v1464 = vadd.f32 %v1462, 0.5
    %v1465 = vmul.f32 %v1452, 0.5
    %v1466 = vmul.f32 %v1456, 0.5
    %v1467 = vadd.f32 %v1465, 0.5
    %v1468 = vadd.f32 %v1466, 0.5
    %v1471 = vrot.slane %v1322, 7
    %v1472 = vrot.slane %v1323, 7
    %v1475 = vmul.f32 %v1463, %v1471
    %v1476 = vmul.f32 %v1464, %v1472
    %v1477 = vmul.f32 %v1459, %v1451
    %v1478 = vmul.f32 %v1460, %v1455
    %v1479 = vadd.f32 %v1475, %v1477
    %v1480 = vadd.f32 %v1476, %v1478
    %v1481 = vtanh.pop %v1479
    %v1482 = vtanh.pop %v1480
    %v1483 = vmul.f32 %v1467, %v1481
    %v1484 = vmul.f32 %v1468, %v1482
    %v1485 = vpack.c.bf16 %v1483, %v1483
    %v1486 = vpack.c.bf16 %v1484, %v1484
    %v1489 = vunpack.c.l.b16 %v1485
    %v1490 = vunpack.c.l.b16 %v1486
    %v1491 = vrot.slane %v1489, 3
    %v1492 = vrot.slane %v1490, 2
    %v1493 = vsel %vm561, %v1492, %v1491
    %v1494 = vpack.c.b16 %v1493, %v1493
    %1496 = vmatprep.subr.bf16.mxu0 %v821
    %1497 = vmatpush1.bf16.msra.mxu0 %v820
    %1498 = vmatprep.subr.bf16.mxu0 %v825
    %1499 = vmatpush1.bf16.msra.mxu0 %v824
    %1500 = vmatprep.subr.bf16.mxu0 %v829
    %1501 = vmatpush1.bf16.msra.mxu0 %v828
    %1502 = vmatprep.subr.bf16.mxu0 %v833
    %1503 = vmatpush1.bf16.msra.mxu0 %v832
    %1504 = vmatprep.subr.bf16.mxu0 %v837
    %1505 = vmatpush1.bf16.msra.mxu0 %v836
    %1506 = vmatprep.subr.bf16.mxu0 %v841
    %1507 = vmatpush1.bf16.msra.mxu0 %v840
    %1508 = vmatprep.subr.bf16.mxu0 %v845
    %1509 = vmatpush1.bf16.msra.mxu0 %v844
    %1510 = vmatprep.subr.bf16.mxu0 %v849
    %1511 = vmatpush1.bf16.msra.mxu0 %v848
    %1512 = vmatprep.subr.bf16.mxu0 0
    %1513 = vmatpush1.bf16.msra.mxu0 0
    %1514 = vmatprep.subr.bf16.mxu0 0
    %1515 = vmatpush1.bf16.msra.mxu0 0
    %1516 = vmatprep.subr.bf16.mxu0 0
    %1517 = vmatpush1.bf16.msra.mxu0 0
    %1518 = vmatprep.subr.bf16.mxu0 0
    %1519 = vmatpush1.bf16.msra.mxu0 0
    %1520 = vmatprep.subr.bf16.mxu0 0
    %1521 = vmatpush1.bf16.msra.mxu0 0
    %1522 = vmatprep.subr.bf16.mxu0 0
    %1523 = vmatpush1.bf16.msra.mxu0 0
    %1524 = vmatprep.subr.bf16.mxu0 0
    %1525 = vmatpush1.bf16.msra.mxu0 0
    %1526 = vmatprep.subr.bf16.mxu0 0
    %1527 = vmatpush1.bf16.msra.mxu0 0
    %1528 = vmatprep.mubr.bf16.mxu0 0
    %1529 = vmatmul.mubr.bf16.gmra.mrb[0].mxu0 %v1494
    %v1530 = vpop.f32.mrb[0].mxu0
    %v1531 = vadd.f32 0.0, %v1530
    %v1532 = vpop.f32.mrb[0].mxu0
    %v1533 = vadd.f32 0.0, %v1532
    %v1534 = vpop.f32.mrb[0].mxu0
    %v1535 = vpop.f32.mrb[0].mxu0
    %1536 = vdwg.mxu0
    %1537 = vmatprep.subr.bf16.mxu0 %v823
    %1538 = vmatpush1.bf16.msra.mxu0 %v822
    %1539 = vmatprep.subr.bf16.mxu0 %v827
    %1540 = vmatpush1.bf16.msra.mxu0 %v826
    %1541 = vmatprep.subr.bf16.mxu0 %v831
    %1542 = vmatpush1.bf16.msra.mxu0 %v830
    %1543 = vmatprep.subr.bf16.mxu0 %v835
    %1544 = vmatpush1.bf16.msra.mxu0 %v834
    %1545 = vmatprep.subr.bf16.mxu0 %v839
    %1546 = vmatpush1.bf16.msra.mxu0 %v838
    %1547 = vmatprep.subr.bf16.mxu0 %v843
    %1548 = vmatpush1.bf16.msra.mxu0 %v842
    %1549 = vmatprep.subr.bf16.mxu0 %v847
    %1550 = vmatpush1.bf16.msra.mxu0 %v846
    %1551 = vmatprep.subr.bf16.mxu0 %v851
    %1552 = vmatpush1.bf16.msra.mxu0 %v850
    %1553 = vmatprep.subr.bf16.mxu0 0
    %1554 = vmatpush1.bf16.msra.mxu0 0
    %1555 = vmatprep.subr.bf16.mxu0 0
    %1556 = vmatpush1.bf16.msra.mxu0 0
    %1557 = vmatprep.subr.bf16.mxu0 0
    %1558 = vmatpush1.bf16.msra.mxu0 0
    %1559 = vmatprep.subr.bf16.mxu0 0
    %1560 = vmatpush1.bf16.msra.mxu0 0
    %1561 = vmatprep.subr.bf16.mxu0 0
    %1562 = vmatpush1.bf16.msra.mxu0 0
    %1563 = vmatprep.subr.bf16.mxu0 0
    %1564 = vmatpush1.bf16.msra.mxu0 0
    %1565 = vmatprep.subr.bf16.mxu0 0
    %1566 = vmatpush1.bf16.msra.mxu0 0
    %1567 = vmatprep.subr.bf16.mxu0 0
    %1568 = vmatpush1.bf16.msra.mxu0 0
    %1569 = vmatprep.mubr.bf16.mxu0 0
    %1570 = vmatmul.mubr.bf16.gmra.mrb[0].mxu0 %v1494
    %v1571 = vpop.f32.mrb[0].mxu0
    %v1572 = vadd.f32 0.0, %v1571
    %v1573 = vpop.f32.mrb[0].mxu0
    %v1574 = vadd.f32 0.0, %v1573
    %v1575 = vpop.f32.mrb[0].mxu0
    %v1576 = vpop.f32.mrb[0].mxu0
    %1577 = vdwg.mxu0
    %v1582 = vrot.slane %v1531, 4
    %v1583 = vrot.slane %v1533, 4
    %v1584 = vrot.slane %v1572, 4
    %v1585 = vrot.slane %v1574, 4
    %v1586 = vrot.slane %v1531, 5
    %v1587 = vrot.slane %v1533, 5
    %v1588 = vrot.slane %v1572, 5
    %v1589 = vrot.slane %v1574, 5
    %v1598 = vadd.f32 %v641, %v1582
    %v1599 = vadd.f32 %v643, %v1583
    %v1600 = vadd.f32 %v684, %v1584
    %v1601 = vadd.f32 %v686, %v1585
    %v1602 = vadd.f32 %v645, %v1586
    %v1603 = vadd.f32 %v647, %v1587
    %v1604 = vadd.f32 %v688, %v1588
    %v1605 = vadd.f32 %v690, %v1589
    %v1606 = vtanh.pop %v1598
    %v1607 = vtanh.pop %v1599
    %v1608 = vtanh.pop %v1600
    %v1609 = vtanh.pop %v1601
    %v1610 = vtanh.pop %v1602
    %v1611 = vtanh.pop %v1603
    %v1612 = vtanh.pop %v1604
    %v1613 = vtanh.pop %v1605
    %v1614 = vmul.f32 %v1606, 0.5
    %v1615 = vmul.f32 %v1610, 0.5
    %v1616 = vadd.f32 %v1614, 0.5
    %v1617 = vadd.f32 %v1615, 0.5
    %v1618 = vmul.f32 %v1607, 0.5
    %v1619 = vmul.f32 %v1611, 0.5
    %v1620 = vadd.f32 %v1618, 0.5
    %v1621 = vadd.f32 %v1619, 0.5
    %v1622 = vmul.f32 %v1609, 0.5
    %v1623 = vmul.f32 %v1613, 0.5
    %v1624 = vadd.f32 %v1622, 0.5
    %v1625 = vadd.f32 %v1623, 0.5
    %v1628 = vrot.slane %v1479, 7
    %v1629 = vrot.slane %v1480, 7
    %v1632 = vmul.f32 %v1620, %v1628
    %v1633 = vmul.f32 %v1621, %v1629
    %v1634 = vmul.f32 %v1616, %v1608
    %v1635 = vmul.f32 %v1617, %v1612
    %v1636 = vadd.f32 %v1632, %v1634
    %v1637 = vadd.f32 %v1633, %v1635
    %v1638 = vtanh.pop %v1636
    %v1639 = vtanh.pop %v1637
    %v1640 = vmul.f32 %v1624, %v1638
    %v1641 = vmul.f32 %v1625, %v1639
    %v1642 = vpack.c.bf16 %v1640, %v1640
    %v1643 = vpack.c.bf16 %v1641, %v1641
    %v1646 = vunpack.c.l.b16 %v1642
    %v1647 = vunpack.c.l.b16 %v1643
    %v1648 = vrot.slane %v1646, 4
    %v1649 = vrot.slane %v1647, 3
    %v1650 = vsel %vm561, %v1649, %v1648
    %v1651 = vpack.c.b16 %v1650, %v1650
    %1653 = vmatprep.subr.bf16.mxu0 %v821
    %1654 = vmatpush1.bf16.msra.mxu0 %v820
    %1655 = vmatprep.subr.bf16.mxu0 %v825
    %1656 = vmatpush1.bf16.msra.mxu0 %v824
    %1657 = vmatprep.subr.bf16.mxu0 %v829
    %1658 = vmatpush1.bf16.msra.mxu0 %v828
    %1659 = vmatprep.subr.bf16.mxu0 %v833
    %1660 = vmatpush1.bf16.msra.mxu0 %v832
    %1661 = vmatprep.subr.bf16.mxu0 %v837
    %1662 = vmatpush1.bf16.msra.mxu0 %v836
    %1663 = vmatprep.subr.bf16.mxu0 %v841
    %1664 = vmatpush1.bf16.msra.mxu0 %v840
    %1665 = vmatprep.subr.bf16.mxu0 %v845
    %1666 = vmatpush1.bf16.msra.mxu0 %v844
    %1667 = vmatprep.subr.bf16.mxu0 %v849
    %1668 = vmatpush1.bf16.msra.mxu0 %v848
    %1669 = vmatprep.subr.bf16.mxu0 0
    %1670 = vmatpush1.bf16.msra.mxu0 0
    %1671 = vmatprep.subr.bf16.mxu0 0
    %1672 = vmatpush1.bf16.msra.mxu0 0
    %1673 = vmatprep.subr.bf16.mxu0 0
    %1674 = vmatpush1.bf16.msra.mxu0 0
    %1675 = vmatprep.subr.bf16.mxu0 0
    %1676 = vmatpush1.bf16.msra.mxu0 0
    %1677 = vmatprep.subr.bf16.mxu0 0
    %1678 = vmatpush1.bf16.msra.mxu0 0
    %1679 = vmatprep.subr.bf16.mxu0 0
    %1680 = vmatpush1.bf16.msra.mxu0 0
    %1681 = vmatprep.subr.bf16.mxu0 0
    %1682 = vmatpush1.bf16.msra.mxu0 0
    %1683 = vmatprep.subr.bf16.mxu0 0
    %1684 = vmatpush1.bf16.msra.mxu0 0
    %1685 = vmatprep.mubr.bf16.mxu0 0
    %1686 = vmatmul.mubr.bf16.gmra.mrb[0].mxu0 %v1651
    %v1687 = vpop.f32.mrb[0].mxu0
    %v1688 = vadd.f32 0.0, %v1687
    %v1689 = vpop.f32.mrb[0].mxu0
    %v1690 = vadd.f32 0.0, %v1689
    %v1691 = vpop.f32.mrb[0].mxu0
    %v1692 = vpop.f32.mrb[0].mxu0
    %1693 = vdwg.mxu0
    %1694 = vmatprep.subr.bf16.mxu0 %v823
    %1695 = vmatpush1.bf16.msra.mxu0 %v822
    %1696 = vmatprep.subr.bf16.mxu0 %v827
    %1697 = vmatpush1.bf16.msra.mxu0 %v826
    %1698 = vmatprep.subr.bf16.mxu0 %v831
    %1699 = vmatpush1.bf16.msra.mxu0 %v830
    %1700 = vmatprep.subr.bf16.mxu0 %v835
    %1701 = vmatpush1.bf16.msra.mxu0 %v834
    %1702 = vmatprep.subr.bf16.mxu0 %v839
    %1703 = vmatpush1.bf16.msra.mxu0 %v838
    %1704 = vmatprep.subr.bf16.mxu0 %v843
    %1705 = vmatpush1.bf16.msra.mxu0 %v842
    %1706 = vmatprep.subr.bf16.mxu0 %v847
    %1707 = vmatpush1.bf16.msra.mxu0 %v846
    %1708 = vmatprep.subr.bf16.mxu0 %v851
    %1709 = vmatpush1.bf16.msra.mxu0 %v850
    %1710 = vmatprep.subr.bf16.mxu0 0
    %1711 = vmatpush1.bf16.msra.mxu0 0
    %1712 = vmatprep.subr.bf16.mxu0 0
    %1713 = vmatpush1.bf16.msra.mxu0 0
    %1714 = vmatprep.subr.bf16.mxu0 0
    %1715 = vmatpush1.bf16.msra.mxu0 0
    %1716 = vmatprep.subr.bf16.mxu0 0
    %1717 = vmatpush1.bf16.msra.mxu0 0
    %1718 = vmatprep.subr.bf16.mxu0 0
    %1719 = vmatpush1.bf16.msra.mxu0 0
    %1720 = vmatprep.subr.bf16.mxu0 0
    %1721 = vmatpush1.bf16.msra.mxu0 0
    %1722 = vmatprep.subr.bf16.mxu0 0
    %1723 = vmatpush1.bf16.msra.mxu0 0
    %1724 = vmatprep.subr.bf16.mxu0 0
    %1725 = vmatpush1.bf16.msra.mxu0 0
    %1726 = vmatprep.mubr.bf16.mxu0 0
    %1727 = vmatmul.mubr.bf16.gmra.mrb[0].mxu0 %v1651
    %v1728 = vpop.f32.mrb[0].mxu0
    %v1729 = vadd.f32 0.0, %v1728
    %v1730 = vpop.f32.mrb[0].mxu0
    %v1731 = vadd.f32 0.0, %v1730
    %v1732 = vpop.f32.mrb[0].mxu0
    %v1733 = vpop.f32.mrb[0].mxu0
    %1734 = vdwg.mxu0
    %v1739 = vrot.slane %v1688, 3
    %v1740 = vrot.slane %v1690, 3
    %v1741 = vrot.slane %v1729, 3
    %v1742 = vrot.slane %v1731, 3
    %v1743 = vrot.slane %v1688, 4
    %v1744 = vrot.slane %v1690, 4
    %v1745 = vrot.slane %v1729, 4
    %v1746 = vrot.slane %v1731, 4
    %v1755 = vadd.f32 %v641, %v1739
    %v1756 = vadd.f32 %v643, %v1740
    %v1757 = vadd.f32 %v684, %v1741
    %v1758 = vadd.f32 %v686, %v1742
    %v1759 = vadd.f32 %v645, %v1743
    %v1760 = vadd.f32 %v647, %v1744
    %v1761 = vadd.f32 %v688, %v1745
    %v1762 = vadd.f32 %v690, %v1746
    %v1763 = vtanh.pop %v1755
    %v1764 = vtanh.pop %v1756
    %v1765 = vtanh.pop %v1757
    %v1766 = vtanh.pop %v1758
    %v1767 = vtanh.pop %v1759
    %v1768 = vtanh.pop %v1760
    %v1769 = vtanh.pop %v1761
    %v1770 = vtanh.pop %v1762
    %v1771 = vmul.f32 %v1763, 0.5
    %v1772 = vmul.f32 %v1767, 0.5
    %v1773 = vadd.f32 %v1771, 0.5
    %v1774 = vadd.f32 %v1772, 0.5
    %v1775 = vmul.f32 %v1764, 0.5
    %v1776 = vmul.f32 %v1768, 0.5
    %v1777 = vadd.f32 %v1775, 0.5
    %v1778 = vadd.f32 %v1776, 0.5
    %v1779 = vmul.f32 %v1766, 0.5
    %v1780 = vmul.f32 %v1770, 0.5
    %v1781 = vadd.f32 %v1779, 0.5
    %v1782 = vadd.f32 %v1780, 0.5
    %v1785 = vrot.slane %v1636, 7
    %v1786 = vrot.slane %v1637, 7
    %v1789 = vmul.f32 %v1777, %v1785
    %v1790 = vmul.f32 %v1778, %v1786
    %v1791 = vmul.f32 %v1773, %v1765
    %v1792 = vmul.f32 %v1774, %v1769
    %v1793 = vadd.f32 %v1789, %v1791
    %v1794 = vadd.f32 %v1790, %v1792
    %v1795 = vtanh.pop %v1793
    %v1796 = vtanh.pop %v1794
    %v1797 = vmul.f32 %v1781, %v1795
    %v1798 = vmul.f32 %v1782, %v1796
    %v1799 = vpack.c.bf16 %v1797, %v1797
    %v1800 = vpack.c.bf16 %v1798, %v1798
    %v1803 = vunpack.c.l.b16 %v1799
    %v1804 = vunpack.c.l.b16 %v1800
    %v1805 = vrot.slane %v1803, 5
    %v1806 = vrot.slane %v1804, 4
    %v1807 = vsel %vm561, %v1806, %v1805
    %v1808 = vpack.c.b16 %v1807, %v1807
    %1810 = vmatprep.subr.bf16.mxu0 %v821
    %1811 = vmatpush1.bf16.msra.mxu0 %v820
    %1812 = vmatprep.subr.bf16.mxu0 %v825
    %1813 = vmatpush1.bf16.msra.mxu0 %v824
    %1814 = vmatprep.subr.bf16.mxu0 %v829
    %1815 = vmatpush1.bf16.msra.mxu0 %v828
    %1816 = vmatprep.subr.bf16.mxu0 %v833
    %1817 = vmatpush1.bf16.msra.mxu0 %v832
    %1818 = vmatprep.subr.bf16.mxu0 %v837
    %1819 = vmatpush1.bf16.msra.mxu0 %v836
    %1820 = vmatprep.subr.bf16.mxu0 %v841
    %1821 = vmatpush1.bf16.msra.mxu0 %v840
    %1822 = vmatprep.subr.bf16.mxu0 %v845
    %1823 = vmatpush1.bf16.msra.mxu0 %v844
    %1824 = vmatprep.subr.bf16.mxu0 %v849
    %1825 = vmatpush1.bf16.msra.mxu0 %v848
    %1826 = vmatprep.subr.bf16.mxu0 0
    %1827 = vmatpush1.bf16.msra.mxu0 0
    %1828 = vmatprep.subr.bf16.mxu0 0
    %1829 = vmatpush1.bf16.msra.mxu0 0
    %1830 = vmatprep.subr.bf16.mxu0 0
    %1831 = vmatpush1.bf16.msra.mxu0 0
    %1832 = vmatprep.subr.bf16.mxu0 0
    %1833 = vmatpush1.bf16.msra.mxu0 0
    %1834 = vmatprep.subr.bf16.mxu0 0
    %1835 = vmatpush1.bf16.msra.mxu0 0
    %1836 = vmatprep.subr.bf16.mxu0 0
    %1837 = vmatpush1.bf16.msra.mxu0 0
    %1838 = vmatprep.subr.bf16.mxu0 0
    %1839 = vmatpush1.bf16.msra.mxu0 0
    %1840 = vmatprep.subr.bf16.mxu0 0
    %1841 = vmatpush1.bf16.msra.mxu0 0
    %1842 = vmatprep.mubr.bf16.mxu0 0
    %1843 = vmatmul.mubr.bf16.gmra.mrb[0].mxu0 %v1808
    %v1844 = vpop.f32.mrb[0].mxu0
    %v1845 = vadd.f32 0.0, %v1844
    %v1846 = vpop.f32.mrb[0].mxu0
    %v1847 = vadd.f32 0.0, %v1846
    %v1848 = vpop.f32.mrb[0].mxu0
    %v1849 = vpop.f32.mrb[0].mxu0
    %1850 = vdwg.mxu0
    %1851 = vmatprep.subr.bf16.mxu0 %v823
    %1852 = vmatpush1.bf16.msra.mxu0 %v822
    %1853 = vmatprep.subr.bf16.mxu0 %v827
    %1854 = vmatpush1.bf16.msra.mxu0 %v826
    %1855 = vmatprep.subr.bf16.mxu0 %v831
    %1856 = vmatpush1.bf16.msra.mxu0 %v830
    %1857 = vmatprep.subr.bf16.mxu0 %v835
    %1858 = vmatpush1.bf16.msra.mxu0 %v834
    %1859 = vmatprep.subr.bf16.mxu0 %v839
    %1860 = vmatpush1.bf16.msra.mxu0 %v838
    %1861 = vmatprep.subr.bf16.mxu0 %v843
    %1862 = vmatpush1.bf16.msra.mxu0 %v842
    %1863 = vmatprep.subr.bf16.mxu0 %v847
    %1864 = vmatpush1.bf16.msra.mxu0 %v846
    %1865 = vmatprep.subr.bf16.mxu0 %v851
    %1866 = vmatpush1.bf16.msra.mxu0 %v850
    %1867 = vmatprep.subr.bf16.mxu0 0
    %1868 = vmatpush1.bf16.msra.mxu0 0
    %1869 = vmatprep.subr.bf16.mxu0 0
    %1870 = vmatpush1.bf16.msra.mxu0 0
    %1871 = vmatprep.subr.bf16.mxu0 0
    %1872 = vmatpush1.bf16.msra.mxu0 0
    %1873 = vmatprep.subr.bf16.mxu0 0
    %1874 = vmatpush1.bf16.msra.mxu0 0
    %1875 = vmatprep.subr.bf16.mxu0 0
    %1876 = vmatpush1.bf16.msra.mxu0 0
    %1877 = vmatprep.subr.bf16.mxu0 0
    %1878 = vmatpush1.bf16.msra.mxu0 0
    %1879 = vmatprep.subr.bf16.mxu0 0
    %1880 = vmatpush1.bf16.msra.mxu0 0
    %1881 = vmatprep.subr.bf16.mxu0 0
    %1882 = vmatpush1.bf16.msra.mxu0 0
    %1883 = vmatprep.mubr.bf16.mxu0 0
    %1884 = vmatmul.mubr.bf16.gmra.mrb[0].mxu0 %v1808
    %v1885 = vpop.f32.mrb[0].mxu0
    %v1886 = vadd.f32 0.0, %v1885
    %v1887 = vpop.f32.mrb[0].mxu0
    %v1888 = vadd.f32 0.0, %v1887
    %v1889 = vpop.f32.mrb[0].mxu0
    %v1890 = vpop.f32.mrb[0].mxu0
    %1891 = vdwg.mxu0
    %v1896 = vrot.slane %v1845, 2
    %v1897 = vrot.slane %v1847, 2
    %v1898 = vrot.slane %v1886, 2
    %v1899 = vrot.slane %v1888, 2
    %v1900 = vrot.slane %v1845, 3
    %v1901 = vrot.slane %v1847, 3
    %v1902 = vrot.slane %v1886, 3
    %v1903 = vrot.slane %v1888, 3
    %v1912 = vadd.f32 %v641, %v1896
    %v1913 = vadd.f32 %v643, %v1897
    %v1914 = vadd.f32 %v684, %v1898
    %v1915 = vadd.f32 %v686, %v1899
    %v1916 = vadd.f32 %v645, %v1900
    %v1917 = vadd.f32 %v647, %v1901
    %v1918 = vadd.f32 %v688, %v1902
    %v1919 = vadd.f32 %v690, %v1903
    %v1920 = vtanh.pop %v1912
    %v1921 = vtanh.pop %v1913
    %v1922 = vtanh.pop %v1914
    %v1923 = vtanh.pop %v1915
    %v1924 = vtanh.pop %v1916
    %v1925 = vtanh.pop %v1917
    %v1926 = vtanh.pop %v1918
    %v1927 = vtanh.pop %v1919
    %v1928 = vmul.f32 %v1920, 0.5
    %v1929 = vmul.f32 %v1924, 0.5
    %v1930 = vadd.f32 %v1928, 0.5
    %v1931 = vadd.f32 %v1929, 0.5
    %v1932 = vmul.f32 %v1921, 0.5
    %v1933 = vmul.f32 %v1925, 0.5
    %v1934 = vadd.f32 %v1932, 0.5
    %v1935 = vadd.f32 %v1933, 0.5
    %v1936 = vmul.f32 %v1923, 0.5
    %v1937 = vmul.f32 %v1927, 0.5
    %v1938 = vadd.f32 %v1936, 0.5
    %v1939 = vadd.f32 %v1937, 0.5
    %v1942 = vrot.slane %v1793, 7
    %v1943 = vrot.slane %v1794, 7
    %v1946 = vmul.f32 %v1934, %v1942
    %v1947 = vmul.f32 %v1935, %v1943
    %v1948 = vmul.f32 %v1930, %v1922
    %v1949 = vmul.f32 %v1931, %v1926
    %v1950 = vadd.f32 %v1946, %v1948
    %v1951 = vadd.f32 %v1947, %v1949
    %v1952 = vtanh.pop %v1950
    %v1953 = vtanh.pop %v1951
    %v1954 = vmul.f32 %v1938, %v1952
    %v1955 = vmul.f32 %v1939, %v1953
    %v1956 = vpack.c.bf16 %v1954, %v1954
    %v1957 = vpack.c.bf16 %v1955, %v1955
    %v1960 = vunpack.c.l.b16 %v1956
    %v1961 = vunpack.c.l.b16 %v1957
    %v1962 = vrot.slane %v1960, 6
    %v1963 = vrot.slane %v1961, 5
    %v1964 = vsel %vm561, %v1963, %v1962
    %v1965 = vpack.c.b16 %v1964, %v1964
    %1967 = vmatprep.subr.bf16.mxu0 %v821
    %1968 = vmatpush1.bf16.msra.mxu0 %v820
    %1969 = vmatprep.subr.bf16.mxu0 %v825
    %1970 = vmatpush1.bf16.msra.mxu0 %v824
    %1971 = vmatprep.subr.bf16.mxu0 %v829
    %1972 = vmatpush1.bf16.msra.mxu0 %v828
    %1973 = vmatprep.subr.bf16.mxu0 %v833
    %1974 = vmatpush1.bf16.msra.mxu0 %v832
    %1975 = vmatprep.subr.bf16.mxu0 %v837
    %1976 = vmatpush1.bf16.msra.mxu0 %v836
    %1977 = vmatprep.subr.bf16.mxu0 %v841
    %1978 = vmatpush1.bf16.msra.mxu0 %v840
    %1979 = vmatprep.subr.bf16.mxu0 %v845
    %1980 = vmatpush1.bf16.msra.mxu0 %v844
    %1981 = vmatprep.subr.bf16.mxu0 %v849
    %1982 = vmatpush1.bf16.msra.mxu0 %v848
    %1983 = vmatprep.subr.bf16.mxu0 0
    %1984 = vmatpush1.bf16.msra.mxu0 0
    %1985 = vmatprep.subr.bf16.mxu0 0
    %1986 = vmatpush1.bf16.msra.mxu0 0
    %1987 = vmatprep.subr.bf16.mxu0 0
    %1988 = vmatpush1.bf16.msra.mxu0 0
    %1989 = vmatprep.subr.bf16.mxu0 0
    %1990 = vmatpush1.bf16.msra.mxu0 0
    %1991 = vmatprep.subr.bf16.mxu0 0
    %1992 = vmatpush1.bf16.msra.mxu0 0
    %1993 = vmatprep.subr.bf16.mxu0 0
    %1994 = vmatpush1.bf16.msra.mxu0 0
    %1995 = vmatprep.subr.bf16.mxu0 0
    %1996 = vmatpush1.bf16.msra.mxu0 0
    %1997 = vmatprep.subr.bf16.mxu0 0
    %1998 = vmatpush1.bf16.msra.mxu0 0
    %1999 = vmatprep.mubr.bf16.mxu0 0
    %2000 = vmatmul.mubr.bf16.gmra.mrb[0].mxu0 %v1965
    %v2001 = vpop.f32.mrb[0].mxu0
    %v2002 = vadd.f32 0.0, %v2001
    %v2003 = vpop.f32.mrb[0].mxu0
    %v2004 = vadd.f32 0.0, %v2003
    %v2005 = vpop.f32.mrb[0].mxu0
    %v2006 = vpop.f32.mrb[0].mxu0
    %2007 = vdwg.mxu0
    %2008 = vmatprep.subr.bf16.mxu0 %v823
    %2009 = vmatpush1.bf16.msra.mxu0 %v822
    %2010 = vmatprep.subr.bf16.mxu0 %v827
    %2011 = vmatpush1.bf16.msra.mxu0 %v826
    %2012 = vmatprep.subr.bf16.mxu0 %v831
    %2013 = vmatpush1.bf16.msra.mxu0 %v830
    %2014 = vmatprep.subr.bf16.mxu0 %v835
    %2015 = vmatpush1.bf16.msra.mxu0 %v834
    %2016 = vmatprep.subr.bf16.mxu0 %v839
    %2017 = vmatpush1.bf16.msra.mxu0 %v838
    %2018 = vmatprep.subr.bf16.mxu0 %v843
    %2019 = vmatpush1.bf16.msra.mxu0 %v842
    %2020 = vmatprep.subr.bf16.mxu0 %v847
    %2021 = vmatpush1.bf16.msra.mxu0 %v846
    %2022 = vmatprep.subr.bf16.mxu0 %v851
    %2023 = vmatpush1.bf16.msra.mxu0 %v850
    %2024 = vmatprep.subr.bf16.mxu0 0
    %2025 = vmatpush1.bf16.msra.mxu0 0
    %2026 = vmatprep.subr.bf16.mxu0 0
    %2027 = vmatpush1.bf16.msra.mxu0 0
    %2028 = vmatprep.subr.bf16.mxu0 0
    %2029 = vmatpush1.bf16.msra.mxu0 0
    %2030 = vmatprep.subr.bf16.mxu0 0
    %2031 = vmatpush1.bf16.msra.mxu0 0
    %2032 = vmatprep.subr.bf16.mxu0 0
    %2033 = vmatpush1.bf16.msra.mxu0 0
    %2034 = vmatprep.subr.bf16.mxu0 0
    %2035 = vmatpush1.bf16.msra.mxu0 0
    %2036 = vmatprep.subr.bf16.mxu0 0
    %2037 = vmatpush1.bf16.msra.mxu0 0
    %2038 = vmatprep.subr.bf16.mxu0 0
    %2039 = vmatpush1.bf16.msra.mxu0 0
    %2040 = vmatprep.mubr.bf16.mxu0 0
    %2041 = vmatmul.mubr.bf16.gmra.mrb[0].mxu0 %v1965
    %v2042 = vpop.f32.mrb[0].mxu0
    %v2043 = vadd.f32 0.0, %v2042
    %v2044 = vpop.f32.mrb[0].mxu0
    %v2045 = vadd.f32 0.0, %v2044
    %v2046 = vpop.f32.mrb[0].mxu0
    %v2047 = vpop.f32.mrb[0].mxu0
    %2048 = vdwg.mxu0
    %v2053 = vrot.slane %v2002, 1
    %v2054 = vrot.slane %v2004, 1
    %v2055 = vrot.slane %v2043, 1
    %v2056 = vrot.slane %v2045, 1
    %v2057 = vrot.slane %v2002, 2
    %v2058 = vrot.slane %v2004, 2
    %v2059 = vrot.slane %v2043, 2
    %v2060 = vrot.slane %v2045, 2
    %v2069 = vadd.f32 %v641, %v2053
    %v2070 = vadd.f32 %v643, %v2054
    %v2071 = vadd.f32 %v684, %v2055
    %v2072 = vadd.f32 %v686, %v2056
    %v2073 = vadd.f32 %v645, %v2057
    %v2074 = vadd.f32 %v647, %v2058
    %v2075 = vadd.f32 %v688, %v2059
    %v2076 = vadd.f32 %v690, %v2060
    %v2077 = vtanh.pop %v2069
    %v2078 = vtanh.pop %v2070
    %v2079 = vtanh.pop %v2071
    %v2080 = vtanh.pop %v2072
    %v2081 = vtanh.pop %v2073
    %v2082 = vtanh.pop %v2074
    %v2083 = vtanh.pop %v2075
    %v2084 = vtanh.pop %v2076
    %v2085 = vmul.f32 %v2077, 0.5
    %v2086 = vmul.f32 %v2081, 0.5
    %v2087 = vadd.f32 %v2085, 0.5
    %v2088 = vadd.f32 %v2086, 0.5
    %v2089 = vmul.f32 %v2078, 0.5
    %v2090 = vmul.f32 %v2082, 0.5
    %v2091 = vadd.f32 %v2089, 0.5
    %v2092 = vadd.f32 %v2090, 0.5
    %v2093 = vmul.f32 %v2080, 0.5
    %v2094 = vmul.f32 %v2084, 0.5
    %v2095 = vadd.f32 %v2093, 0.5
    %v2096 = vadd.f32 %v2094, 0.5
    %v2099 = vrot.slane %v1950, 7
    %v2100 = vrot.slane %v1951, 7
    %v2103 = vmul.f32 %v2091, %v2099
    %v2104 = vmul.f32 %v2092, %v2100
    %v2105 = vmul.f32 %v2087, %v2079
    %v2106 = vmul.f32 %v2088, %v2083
    %v2107 = vadd.f32 %v2103, %v2105
    %v2108 = vadd.f32 %v2104, %v2106
    %v2109 = vtanh.pop %v2107
    %v2110 = vtanh.pop %v2108
    %v2111 = vmul.f32 %v2095, %v2109
    %v2112 = vmul.f32 %v2096, %v2110
    %vm2113 = vcmask 1040384
    %v2114 = vsel %vm2113, %v1018, %v1170
    %v2115 = vsel %vm2113, %v1019, %v1171
    %vm2116 = vcmask 1041408
    %v2117 = vsel %vm2116, %v2114, %v1326
    %v2118 = vsel %vm2116, %v2115, %v1327
    %vm2119 = vcmask 1042432
    %v2120 = vsel %vm2119, %v2117, %v1483
    %v2121 = vsel %vm2119, %v2118, %v1484
    %vm2122 = vcmask 1043456
    %v2123 = vsel %vm2122, %v2120, %v1640
    %v2124 = vsel %vm2122, %v2121, %v1641
    %vm2125 = vcmask 1044480
    %v2126 = vsel %vm2125, %v2123, %v1797
    %v2127 = vsel %vm2125, %v2124, %v1798
    %vm2128 = vcmask 1045504
    %v2129 = vsel %vm2128, %v2126, %v1954
    %v2130 = vsel %vm2128, %v2127, %v1955
    %vm2131 = vcmask 1046528
    %v2132 = vsel %vm2131, %v2129, %v2111
    %v2133 = vsel %vm2131, %v2130, %v2112
    %v2134 = vpack.c.bf16 %v2133, %v2132
    %v2135 = vld [vmem:[#allocation9] sm:$0xf]
    %v2136 = vld [vmem:[#allocation9 + $0x4] sm:$0xf]
    %v2137 = vld [vmem:[#allocation9 + $0x8] sm:$0xf]
    %v2138 = vld [vmem:[#allocation9 + $0xc] sm:$0xf]
    %v2139 = vld [vmem:[#allocation9 + $0x10] sm:$0xf]
    %v2140 = vld [vmem:[#allocation9 + $0x14] sm:$0xf]
    %v2141 = vld [vmem:[#allocation9 + $0x18] sm:$0xf]
    %v2142 = vld [vmem:[#allocation9 + $0x1c] sm:$0xf]
    %v2143 = vld [vmem:[#allocation9 + $0x20] sm:$0xf]
    %v2144 = vld [vmem:[#allocation9 + $0x24] sm:$0xf]
    %v2145 = vld [vmem:[#allocation9 + $0x28] sm:$0xf]
    %v2146 = vld [vmem:[#allocation9 + $0x2c] sm:$0xf]
    %v2147 = vld [vmem:[#allocation9 + $0x30] sm:$0xf]
    %v2148 = vld [vmem:[#allocation9 + $0x34] sm:$0xf]
    %v2149 = vld [vmem:[#allocation9 + $0x38] sm:$0xf]
    %v2150 = vld [vmem:[#allocation9 + $0x3c] sm:$0xf]
    %v2151 = vld [vmem:[%s7] sm:$0x1]
    %v2153 = vlaneseq
    %v2154 = vshrl.u32 %v2153, 7
    %v2155 = vsub.s32 0, %v2154
    %v2156 = vrot.slane %v2151, %v2155
    %v2174 = vunpack.c.l.b16 %v2135
    %v2175 = vunpack.c.l.b16 %v2136
    %v2176 = vunpack.c.l.b16 %v2137
    %v2177 = vunpack.c.l.b16 %v2138
    %v2178 = vunpack.c.l.b16 %v2139
    %v2179 = vunpack.c.l.b16 %v2140
    %v2180 = vunpack.c.l.b16 %v2141
    %v2181 = vunpack.c.l.b16 %v2142
    %v2182 = vunpack.c.l.b16 %v2143
    %v2183 = vunpack.c.l.b16 %v2144
    %v2184 = vunpack.c.l.b16 %v2145
    %v2185 = vunpack.c.l.b16 %v2146
    %v2186 = vunpack.c.l.b16 %v2147
    %v2187 = vunpack.c.l.b16 %v2148
    %v2188 = vunpack.c.l.b16 %v2149
    %v2189 = vunpack.c.l.b16 %v2150
    %v2190 = vpack.c.b16 %v2175, %v2174
    %v2191 = vpack.c.b16 %v2177, %v2176
    %v2192 = vpack.c.b16 %v2179, %v2178
    %v2193 = vpack.c.b16 %v2181, %v2180
    %v2194 = vpack.c.b16 %v2183, %v2182
    %v2195 = vpack.c.b16 %v2185, %v2184
    %v2196 = vpack.c.b16 %v2187, %v2186
    %v2197 = vpack.c.b16 %v2189, %v2188
    %2206 = vmatprep.subr.bf16.mxu0 0
    %2207 = vmatpush1.bf16.msra.mxu0 %v2190
    %2208 = vmatprep.subr.bf16.mxu0 0
    %2209 = vmatpush1.bf16.msra.mxu0 %v2191
    %2210 = vmatprep.subr.bf16.mxu0 0
    %2211 = vmatpush1.bf16.msra.mxu0 %v2192
    %2212 = vmatprep.subr.bf16.mxu0 0
    %2213 = vmatpush1.bf16.msra.mxu0 %v2193
    %2214 = vmatprep.subr.bf16.mxu0 0
    %2215 = vmatpush1.bf16.msra.mxu0 %v2194
    %2216 = vmatprep.subr.bf16.mxu0 0
    %2217 = vmatpush1.bf16.msra.mxu0 %v2195
    %2218 = vmatprep.subr.bf16.mxu0 0
    %2219 = vmatpush1.bf16.msra.mxu0 %v2196
    %2220 = vmatprep.subr.bf16.mxu0 0
    %2221 = vmatpush1.bf16.msra.mxu0 %v2197
    %2222 = vmatprep.subr.bf16.mxu0 0
    %2223 = vmatpush1.bf16.msra.mxu0 0
    %2224 = vmatprep.subr.bf16.mxu0 0
    %2225 = vmatpush1.bf16.msra.mxu0 0
    %2226 = vmatprep.subr.bf16.mxu0 0
    %2227 = vmatpush1.bf16.msra.mxu0 0
    %2228 = vmatprep.subr.bf16.mxu0 0
    %2229 = vmatpush1.bf16.msra.mxu0 0
    %2230 = vmatprep.subr.bf16.mxu0 0
    %2231 = vmatpush1.bf16.msra.mxu0 0
    %2232 = vmatprep.subr.bf16.mxu0 0
    %2233 = vmatpush1.bf16.msra.mxu0 0
    %2234 = vmatprep.subr.bf16.mxu0 0
    %2235 = vmatpush1.bf16.msra.mxu0 0
    %2236 = vmatprep.subr.bf16.mxu0 0
    %2237 = vmatpush1.bf16.msra.mxu0 0
    %2238 = vmatprep.mubr.bf16.mxu0 0
    %2239 = vmatmul.mubr.bf16.gmra.mrb[0].mxu0 %v2134
    %v2240 = vpop.f32.mrb[0].mxu0
    %v2241 = vadd.f32 %v2156, %v2240
    %v2242 = vpop.f32.mrb[0].mxu0
    %v2243 = vpop.f32.mrb[0].mxu0
    %v2244 = vadd.f32 %v2156, %v2243
    %v2245 = vpop.f32.mrb[0].mxu0
    %2246 = vdwg.mxu0
    %v2247 = vtanh.pop %v2241
    %v2248 = vtanh.pop %v2244
    %v2249 = vld [vmem:[%s8] sm:$0x1]
    %v2251 = vlaneseq
    %v2252 = vshrl.u32 %v2251, 7
    %v2253 = vsub.s32 0, %v2252
    %v2254 = vrot.slane %v2249, %v2253
    %v2256 = vmul.f32 %v2247, %v2254
    %v2257 = vmul.f32 %v2248, %v2254
    %2258 = vadd.xlane.f32.xlu0 %v2256
    %v2259 = vpop.xlane.xlu0 %2258
    %2260 = vadd.xlane.f32.xlu0 %v2257
    %v2261 = vpop.xlane.xlu0 %2260
    %s2262 = sld [smem:[#allocation3]]
    %v2263 = vstv %s2262
    %v2264 = vadd.f32 %v2259, %v2263
    %v2265 = vadd.f32 %v2261, %v2263
    %v2268 = vlaneseq
    %v2269 = vshrl.u32 %v2268, 7
    %v2270 = vsub.s32 %v414, %v2269
    %v2271 = vrot.slane %v2264, %v2270
    %v2272 = vlaneseq
    %v2273 = vshrl.u32 %v2272, 7
    %v2274 = vsub.s32 %v414, %v2273
    %v2275 = vrot.slane %v2265, %v2274
    %v2276 = vsel %vm561, %v2275, %v2271
    %vm2278 = vcmask 58368
    %2279 = vst.msk [vmem:[#allocation11] sm:$0x3] %vm2278, %v2276
    %v2280 = vsel %vm2278, %v2276, -inf
    %2281 = vmax.xlane.f32.xlu0 %v2280
    %v2282 = vpop.xlane.xlu0 %2281
    %v2284 = vlaneseq
    %v2285 = vshrl.u32 %v2284, 7
    %v2286 = vsub.s32 0, %v2285
    %v2287 = vrot.slane %v2282, %v2286
    %v2288 = vlaneseq
    %v2289 = vshrl.u32 %v2288, 7
    %v2290 = vsub.s32 1, %v2289
    %v2291 = vrot.slane %v2282, %v2290
    %v2294 = vsub.f32 %v2264, %v2287
    %v2295 = vsub.f32 %v2265, %v2291
    %v2296 = vmul.f32 %v2294, 1.442695
    %v2297 = vpow.pop %v2296
    %v2298 = vmul.f32 %v2295, 1.442695
    %v2299 = vpow.pop %v2298
    %2302 = vset.pattern.permute.xlu0 0
    %2303 = vperm.xlu0 %2302, %v2297
    %v2304 = vpop.permute.xlu0 %2303
    %2305 = vset.pattern.permute.xlu0 0
    %2306 = vperm.xlu0 %2305, %v2299
    %v2307 = vpop.permute.xlu0 %2306
    %v2308 = vlaneseq
    %v2309 = vshrl.u32 %v2308, 7
    %v2310 = vsub.s32 %v414, %v2309
    %v2311 = vrot.slane %v2304, %v2310
    %v2312 = vlaneseq
    %v2313 = vshrl.u32 %v2312, 7
    %v2314 = vsub.s32 %v414, %v2313
    %v2315 = vrot.slane %v2307, %v2314
    %v2316 = vsel %vm561, %v2315, %v2311
    %v2318 = vsel %vm2278, %v2316, 0.0
    %2319 = vadd.xlane.f32.xlu0 %v2318
    %v2320 = vpop.xlane.xlu0 %2319
    %v2322 = vlaneseq
    %v2323 = vshrl.u32 %v2322, 7
    %v2324 = vsub.s32 0, %v2323
    %v2325 = vrot.slane %v2320, %v2324
    %v2326 = vlaneseq
    %v2327 = vshrl.u32 %v2326, 7
    %v2328 = vsub.s32 1, %v2327
    %v2329 = vrot.slane %v2320, %v2328
    %v2332 = vrcp.pop %v2325
    %v2333 = vmul.f32 %v2297, %v2332
    %v2334 = vrcp.pop %v2329
    %v2335 = vmul.f32 %v2299, %v2334
    %2337 = vset.pattern.permute.xlu0 0
    %2338 = vperm.xlu0 %2337, %v2333
    %v2339 = vpop.permute.xlu0 %2338
    %2342 = vset.pattern.permute.xlu0 0
    %2343 = vperm.xlu0 %2342, %v2335
    %v2344 = vpop.permute.xlu0 %2343
    %v2346 = vmul.f32 %v2339, %v2132
    %v2347 = vmul.f32 %v2344, %v2133
    %v2348 = vrot.slane %v2346, 4
    %v2349 = vadd.f32 %v2346, %v2348
    %v2350 = vrot.slane %v2349, 2
    %v2351 = vadd.f32 %v2349, %v2350
    %v2352 = vrot.slane %v2351, 1
    %v2353 = vadd.f32 %v2351, %v2352
    %v2354 = vrot.slane %v2347, 4
    %v2355 = vadd.f32 %v2347, %v2354
    %v2356 = vrot.slane %v2355, 2
    %v2357 = vadd.f32 %v2355, %v2356
    %v2358 = vrot.slane %v2357, 1
    %v2359 = vadd.f32 %v2357, %v2358
    %v2360 = vld [vmem:[%s10] sm:$0x3]
    %v2361 = vlaneseq
    %v2362 = vshrl.u32 %v2361, 7
    %v2363 = vsub.s32 0, %v2362
    %v2364 = vrot.slane %v2360, %v2363
    %v2365 = vmul.f32 %v2353, %v2364
    %v2366 = vmul.f32 %v2359, %v2364
    %v2369 = vrot.slane %v2366, 7
    %v2370 = vsel %vm561, %v2369, %v2365
    %v2372 = vsel %vm2116, %v2370, 0.0
    %2373 = vadd.xlane.f32.xlu0 %v2372
    %v2374 = vpop.xlane.xlu0 %2373
    %v2375 = vlaneseq
    %v2376 = vshrl.u32 %v2375, 7
    %v2377 = vsub.s32 1, %v2376
    %v2378 = vrot.slane %v2360, %v2377
    %v2379 = vmul.f32 %v2353, %v2378
    %v2380 = vmul.f32 %v2359, %v2378
    %v2383 = vrot.slane %v2380, 7
    %v2384 = vsel %vm561, %v2383, %v2379
    %v2386 = vsel %vm2116, %v2384, 0.0
    %2387 = vadd.xlane.f32.xlu0 %v2386
    %v2388 = vpop.xlane.xlu0 %2387
    %vm2389 = vcmask 7168
    %v2390 = vsel %vm2389, %v2374, %v2388
    %v2391 = vld [vmem:[%s11] sm:$0x1]
    %v2393 = vlaneseq
    %v2394 = vshrl.u32 %v2393, 7
    %v2395 = vsub.s32 0, %v2394
    %v2396 = vrot.slane %v2391, %v2395
    %v2398 = vadd.f32 %v2390, %v2396
    %vm2399 = vcmask 9216
    %v2400 = vsel %vm2399, %v2398, -inf
    %2401 = vmax.xlane.f32.xlu0 %v2400
    %v2402 = vpop.xlane.xlu0 %2401
    %v2403 = vsub.f32 %v2398, %v2402
    %v2404 = vmul.f32 %v2403, 1.442695
    %v2405 = vpow.pop %v2404
    %v2406 = vsel %vm2399, %v2405, 0.0
    %2407 = vadd.xlane.f32.xlu0 %v2406
    %v2408 = vpop.xlane.xlu0 %2407
    %v2409 = vrcp.pop %v2408
    %v2410 = vmul.f32 %v2405, %v2409
    %2411 = vst.msk [vmem:[#allocation10] sm:$0x3] %vm2399, %v2410
    // Predicated region
    $region62: #{model_forward.1} parent=1 // pred_check
      _
    $region63: #{model_forward.1} parent=1 // pred_check_branch
      %2413 = sbr.rel (0) target = $region65
    $region64: #{model_forward.1} parent=1 // pred_region
      %s2415 = ssub.s32 32, 32
      %2416 = vsyncadd [#allocation6], %s2415
      %s2418 = sshll.u32 [#allocation10], 4
      %s2419 = int_to_ptr.vmem [resolvable:$true] %s2418
      %2421 = dma.vmem_to_hbm [thread:$0]  %s2419, 32, %s12, [#allocation6]
    $region65: #{model_forward.1} parent=1 // pred_fallthru
      _
    // Predicated region
    $region66: #{model_forward.1} parent=1 // pred_check
      _
    $region67: #{model_forward.1} parent=1 // pred_check_branch
      %2423 = sbr.rel (0) target = $region69
    $region68: #{model_forward.1} parent=1 // pred_region
      %s2425 = ssub.s32 32, 32
      %2426 = vsyncadd [#allocation12], %s2425
      %s2428 = sshll.u32 [#allocation11], 4
      %s2429 = int_to_ptr.vmem [resolvable:$true] %s2428
      %2431 = dma.vmem_to_hbm [thread:$0]  %s2429, 32, %s13, [#allocation12]
    $region69: #{model_forward.1} parent=1 // pred_fallthru
      _
    // Predicated region
    $region70: #{model_forward.1} parent=1 // pred_check
      _
    $region71: #{model_forward.1} parent=1 // pred_check_branch
      %2433 = sbr.rel (0) target = $region73
    $region72: #{model_forward.1} parent=1 // pred_region
      %2434 = dma.done [#allocation6], 32
    $region73: #{model_forward.1} parent=1 // pred_fallthru
      _
    // Predicated region
    $region74: #{model_forward.1} parent=1 // pred_check
      _
    $region75: #{model_forward.1} parent=1 // pred_check_branch
      %2436 = sbr.rel (0) target = $region77
    $region76: #{model_forward.1} parent=1 // pred_region
      %2437 = dma.done [#allocation12], 32
    $region77: #{model_forward.1} parent=1 // pred_fallthru
      _
    %2438 = vsyncpa [#allocation5], 1
    %2439 = vsyncpa [#allocation8], 1
    %2440 = vsyncpa [#allocation6], 1
    %2441 = vsyncpa [#allocation12], 1

</llo_original>
